<compile_context>
chip_gen: v7x
topology: tpu7x:2x2x1
jax: 0.10.0
libtpu: 0.0.40
codegen_flags: <defaults>
</compile_context>

<pallas_src>
import functools

import jax
import jax.numpy as jnp
from jax.experimental import pallas as pl
from jax.experimental.pallas import tpu as pltpu

LEAKY_SLOPE = 0.01  # PyTorch nn.LeakyReLU default negative_slope

# Hidden widths of the 7 Linear layers (out_features per layer).
_OUT_DIMS = (128, 128, 128, 64, 64, 64, 1)


def _leaky_relu_f32(x):
    return jnp.where(x > 0, x, LEAKY_SLOPE * x)


def _round_up(n, m):
    return (n + m - 1) // m * m


def mlp_kernel(x_ref,
               w0_ref, w1_ref, w2_ref, w3_ref, w4_ref, w5_ref,
               misc_ref,
               out_ref):
    """Full LeakyReluFey MLP for one batch tile, entirely in VMEM.

    misc_ref is an (8, 128) f32 array:
      rows 0..6  : biases of layers 0..6 (zero padded on the lane axis)
      row  7     : final-layer weight (64,1) laid out as a (64,) row vector
    """
    misc = misc_ref[...]                       # (8, 128) f32, resident
    h = x_ref[...].astype(jnp.float32)         # (tile_b, x_dim) f32

    def layer(h, w_ref, row, width):
        # bf16 MXU operands, f32 accumulation; bias + LeakyReLU stay f32 on the VPU.
        y = jnp.dot(h.astype(jnp.bfloat16), w_ref[...],
                    preferred_element_type=jnp.float32)
        y = y + misc[row:row + 1, :width]
        return _leaky_relu_f32(y)

    h = layer(h, w0_ref, 0, 128)
    h = layer(h, w1_ref, 1, 128)
    h = layer(h, w2_ref, 2, 128)
    h = layer(h, w3_ref, 3, 64)
    h = layer(h, w4_ref, 4, 64)
    h = layer(h, w5_ref, 5, 64)

    # Final Linear(64 -> 1): N=1 matmul would waste a full MXU pass, so do it as a
    # VPU multiply + lane (XLU) reduction in f32.
    w6_row = misc[7:8, :64]                    # (1, 64) f32
    out = jnp.sum(h * w6_row, axis=-1, keepdims=True) + misc[6:7, 0:1]

    out_ref[...] = out.astype(out_ref.dtype)


@functools.partial(jax.jit, static_argnames=("block_b",))
def regression_nn_forward(x, params, block_b=256):
    """x: (B, x_dim) f32.  params: list of 7 (W, b) with W (in, out), b (1, out)."""
    B, x_dim = x.shape
    assert len(params) == 7

    # Batch tile: multiple of 8 (f32 sublane); default 256 fills MXU rows.  Clamp for
    # small batches (shapes are static under jit, so this is a Python int).
    eff_bb = min(block_b, _round_up(B, 8))
    n_tiles = pl.cdiv(B, eff_bb)

    # bf16 weights for the six MXU layers (halves weight DMA bytes, native MXU dtype).
    w_list = [params[i][0].astype(jnp.bfloat16) for i in range(6)]

    # Pack all biases + the final-layer weight row into one resident (8,128) f32 array.
    misc = jnp.zeros((8, 128), jnp.float32)
    for i, (_, b) in enumerate(params):
        misc = misc.at[i, :b.shape[-1]].set(b.reshape(-1))
    misc = misc.at[7, :64].set(params[6][0].reshape(-1))  # w6: (64,1) -> row vector

    in_specs = [pl.BlockSpec((eff_bb, x_dim), lambda i: (i, 0))]
    for w in w_list:
        # Constant block index -> resident in VMEM across the whole grid.
        in_specs.append(pl.BlockSpec(w.shape, lambda i: (0, 0)))
    in_specs.append(pl.BlockSpec((8, 128), lambda i: (0, 0)))

    out = pl.pallas_call(
        mlp_kernel,
        out_shape=jax.ShapeDtypeStruct((B, 1), jnp.float32),
        grid_spec=pltpu.PrefetchScalarGridSpec(
            num_scalar_prefetch=0,
            grid=(n_tiles,),
            in_specs=in_specs,
            out_specs=pl.BlockSpec((eff_bb, 1), lambda i: (i, 0)),
        ),
        compiler_params=pltpu.CompilerParams(
            dimension_semantics=("parallel",)),
    )(x, *w_list, misc)
    return out


def init_params(key, x_dim):
    """Deterministic init matching the LeakyReluFey layer shapes.

    PyTorch Linear stores W as (out, in); here we build (in, out) directly with the
    same U(-1/sqrt(in), 1/sqrt(in)) distribution as torch's default init.
    """
    dims = [(x_dim, 128), (128, 128), (128, 128), (128, 64),
            (64, 64), (64, 64), (64, 1)]
    params = []
    for (fan_in, fan_out) in dims:
        key, kw, kb = jax.random.split(key, 3)
        bound = 1.0 / jnp.sqrt(float(fan_in))
        w = jax.random.uniform(kw, (fan_in, fan_out), jnp.float32, -bound, bound)
        b = jax.random.uniform(kb, (1, fan_out), jnp.float32, -bound, bound)
        params.append((w, b))
    return params


def reference_forward(x, params, bf16_dots=False):
    """Pure-JAX reference.  bf16_dots=True mirrors the kernel's mixed precision."""
    h = x
    n = len(params)
    for i, (w, b) in enumerate(params):
        if bf16_dots and i < n - 1:
            y = jnp.dot(h.astype(jnp.bfloat16), w.astype(jnp.bfloat16),
                        preferred_element_type=jnp.float32) + b
        else:
            y = jnp.dot(h, w, preferred_element_type=jnp.float32) + b
        h = _leaky_relu_f32(y) if i < n - 1 else y
    return h


if __name__ == "__main__":
    key = jax.random.PRNGKey(0)
    k_x, k_p = jax.random.split(key)

    # Small but realistic shapes: batch matches the module's default batch_size=1000,
    # x_dim = len(y)+1 style small feature count.  With block_b=256 this gives 4 grid
    # tiles (last one partial), exercising megacore sharding and masked writeback.
    batch, x_dim = 1000, 8
    x = jax.random.normal(k_x, (batch, x_dim), jnp.float32)
    params = init_params(k_p, x_dim)

    out = regression_nn_forward(x, params)          # default block_b=256
    out = jax.block_until_ready(out)
    assert out.shape == (batch, 1)

    # 1) Tight check vs. a reference using the same bf16-operand / f32-accum math
    #    (validates the Pallas plumbing: tiling, residency, partial tile, reduction).
    ref_bf16 = reference_forward(x, params, bf16_dots=True)
    assert jnp.allclose(out, ref_bf16, atol=1e-3, rtol=1e-3), "mismatch vs bf16-matched ref"

    # 2) Loose check vs. the full-f32 reference (bf16 operands lose mantissa; f32 accum).
    ref_f32 = reference_forward(x, params, bf16_dots=False)
    assert jnp.allclose(out, ref_f32, atol=5e-2, rtol=5e-2), "mismatch vs f32 reference"

    print("KERNEL_OK")
</pallas_src>

<mosaic_0001>
module attributes {stable_mosaic.version = 11 : i64} {
  func.func @mlp_kernel(%arg0: i32, %arg1: memref<256x8xf32, #tpu.memory_space<vmem>>, %arg2: memref<8x128xbf16, #tpu.memory_space<vmem>>, %arg3: memref<128x128xbf16, #tpu.memory_space<vmem>>, %arg4: memref<128x128xbf16, #tpu.memory_space<vmem>>, %arg5: memref<128x64xbf16, #tpu.memory_space<vmem>>, %arg6: memref<64x64xbf16, #tpu.memory_space<vmem>>, %arg7: memref<64x64xbf16, #tpu.memory_space<vmem>>, %arg8: memref<8x128xf32, #tpu.memory_space<vmem>>, %arg9: memref<256x1xf32, #tpu.memory_space<vmem>>) attributes {dimension_semantics = [#tpu.dimension_semantics<parallel>], iteration_bounds = array<i64: 4>, scalar_prefetch = 0 : i64, scratch_operands = 0 : i64, tpu.core_type = #tpu.core_type<tc>, window_params = [{transform_indices = @transform_0, window_bounds = array<i64: 256, 8>}, {pipeline_mode = #tpu.pipeline_mode<synchronous>, transform_indices = @transform_1, window_bounds = array<i64: 8, 128>}, {pipeline_mode = #tpu.pipeline_mode<synchronous>, transform_indices = @transform_2, window_bounds = array<i64: 128, 128>}, {pipeline_mode = #tpu.pipeline_mode<synchronous>, transform_indices = @transform_3, window_bounds = array<i64: 128, 128>}, {pipeline_mode = #tpu.pipeline_mode<synchronous>, transform_indices = @transform_4, window_bounds = array<i64: 128, 64>}, {pipeline_mode = #tpu.pipeline_mode<synchronous>, transform_indices = @transform_5, window_bounds = array<i64: 64, 64>}, {pipeline_mode = #tpu.pipeline_mode<synchronous>, transform_indices = @transform_6, window_bounds = array<i64: 64, 64>}, {pipeline_mode = #tpu.pipeline_mode<synchronous>, transform_indices = @transform_7, window_bounds = array<i64: 8, 128>}, {transform_indices = @transform_8, window_bounds = array<i64: 256, 1>}]} {
    %c0 = arith.constant 0 : index
    %c0_0 = arith.constant 0 : index
    %0 = vector.load %arg8[%c0, %c0_0] : memref<8x128xf32, #tpu.memory_space<vmem>>, vector<8x128xf32>
    %c0_1 = arith.constant 0 : index
    %c0_2 = arith.constant 0 : index
    %1 = vector.load %arg1[%c0_1, %c0_2] : memref<256x8xf32, #tpu.memory_space<vmem>>, vector<256x8xf32>
    %2 = arith.truncf %1 : vector<256x8xf32> to vector<256x8xbf16>
    %c0_3 = arith.constant 0 : index
    %c0_4 = arith.constant 0 : index
    %3 = vector.load %arg2[%c0_3, %c0_4] : memref<8x128xbf16, #tpu.memory_space<vmem>>, vector<8x128xbf16>
    %cst = arith.constant dense<0.000000e+00> : vector<256x128xf32>
    %4 = tpu.matmul %2, %3, %cst {dimension_numbers = #tpu.dot_dimension_numbers<[1], [0], [0], [1], [0, 0, 1, 1], [], []>} : vector<256x8xbf16>, vector<8x128xbf16>, vector<256x128xf32> -> vector<256x128xf32>
    %5 = vector.extract_strided_slice %0 {offsets = [0, 0], sizes = [1, 128], strides = [1, 1]} : vector<8x128xf32> to vector<1x128xf32>
    %6 = vector.broadcast %5 : vector<1x128xf32> to vector<256x128xf32>
    %7 = arith.addf %4, %6 : vector<256x128xf32>
    %cst_5 = arith.constant 0.000000e+00 : f32
    %8 = vector.broadcast %cst_5 : f32 to vector<256x128xf32>
    %9 = arith.cmpf ogt, %7, %8 : vector<256x128xf32>
    %cst_6 = arith.constant 0.00999999977 : f32
    %10 = vector.broadcast %cst_6 : f32 to vector<256x128xf32>
    %11 = arith.mulf %10, %7 : vector<256x128xf32>
    %12 = arith.select %9, %7, %11 : vector<256x128xi1>, vector<256x128xf32>
    %13 = arith.truncf %12 : vector<256x128xf32> to vector<256x128xbf16>
    %c0_7 = arith.constant 0 : index
    %c0_8 = arith.constant 0 : index
    %14 = vector.load %arg3[%c0_7, %c0_8] : memref<128x128xbf16, #tpu.memory_space<vmem>>, vector<128x128xbf16>
    %cst_9 = arith.constant dense<0.000000e+00> : vector<256x128xf32>
    %15 = tpu.matmul %13, %14, %cst_9 {dimension_numbers = #tpu.dot_dimension_numbers<[1], [0], [0], [1], [0, 0, 1, 1], [], []>} : vector<256x128xbf16>, vector<128x128xbf16>, vector<256x128xf32> -> vector<256x128xf32>
    %16 = vector.extract_strided_slice %0 {offsets = [1, 0], sizes = [1, 128], strides = [1, 1]} : vector<8x128xf32> to vector<1x128xf32>
    %17 = vector.broadcast %16 : vector<1x128xf32> to vector<256x128xf32>
    %18 = arith.addf %15, %17 : vector<256x128xf32>
    %cst_10 = arith.constant 0.000000e+00 : f32
    %19 = vector.broadcast %cst_10 : f32 to vector<256x128xf32>
    %20 = arith.cmpf ogt, %18, %19 : vector<256x128xf32>
    %cst_11 = arith.constant 0.00999999977 : f32
    %21 = vector.broadcast %cst_11 : f32 to vector<256x128xf32>
    %22 = arith.mulf %21, %18 : vector<256x128xf32>
    %23 = arith.select %20, %18, %22 : vector<256x128xi1>, vector<256x128xf32>
    %24 = arith.truncf %23 : vector<256x128xf32> to vector<256x128xbf16>
    %c0_12 = arith.constant 0 : index
    %c0_13 = arith.constant 0 : index
    %25 = vector.load %arg4[%c0_12, %c0_13] : memref<128x128xbf16, #tpu.memory_space<vmem>>, vector<128x128xbf16>
    %cst_14 = arith.constant dense<0.000000e+00> : vector<256x128xf32>
    %26 = tpu.matmul %24, %25, %cst_14 {dimension_numbers = #tpu.dot_dimension_numbers<[1], [0], [0], [1], [0, 0, 1, 1], [], []>} : vector<256x128xbf16>, vector<128x128xbf16>, vector<256x128xf32> -> vector<256x128xf32>
    %27 = vector.extract_strided_slice %0 {offsets = [2, 0], sizes = [1, 128], strides = [1, 1]} : vector<8x128xf32> to vector<1x128xf32>
    %28 = vector.broadcast %27 : vector<1x128xf32> to vector<256x128xf32>
    %29 = arith.addf %26, %28 : vector<256x128xf32>
    %cst_15 = arith.constant 0.000000e+00 : f32
    %30 = vector.broadcast %cst_15 : f32 to vector<256x128xf32>
    %31 = arith.cmpf ogt, %29, %30 : vector<256x128xf32>
    %cst_16 = arith.constant 0.00999999977 : f32
    %32 = vector.broadcast %cst_16 : f32 to vector<256x128xf32>
    %33 = arith.mulf %32, %29 : vector<256x128xf32>
    %34 = arith.select %31, %29, %33 : vector<256x128xi1>, vector<256x128xf32>
    %35 = arith.truncf %34 : vector<256x128xf32> to vector<256x128xbf16>
    %c0_17 = arith.constant 0 : index
    %c0_18 = arith.constant 0 : index
    %36 = vector.load %arg5[%c0_17, %c0_18] : memref<128x64xbf16, #tpu.memory_space<vmem>>, vector<128x64xbf16>
    %cst_19 = arith.constant dense<0.000000e+00> : vector<256x64xf32>
    %37 = tpu.matmul %35, %36, %cst_19 {dimension_numbers = #tpu.dot_dimension_numbers<[1], [0], [0], [1], [0, 0, 1, 1], [], []>} : vector<256x128xbf16>, vector<128x64xbf16>, vector<256x64xf32> -> vector<256x64xf32>
    %38 = vector.extract_strided_slice %0 {offsets = [3, 0], sizes = [1, 64], strides = [1, 1]} : vector<8x128xf32> to vector<1x64xf32>
    %39 = vector.broadcast %38 : vector<1x64xf32> to vector<256x64xf32>
    %40 = arith.addf %37, %39 : vector<256x64xf32>
    %cst_20 = arith.constant 0.000000e+00 : f32
    %41 = vector.broadcast %cst_20 : f32 to vector<256x64xf32>
    %42 = arith.cmpf ogt, %40, %41 : vector<256x64xf32>
    %cst_21 = arith.constant 0.00999999977 : f32
    %43 = vector.broadcast %cst_21 : f32 to vector<256x64xf32>
    %44 = arith.mulf %43, %40 : vector<256x64xf32>
    %45 = arith.select %42, %40, %44 : vector<256x64xi1>, vector<256x64xf32>
    %46 = arith.truncf %45 : vector<256x64xf32> to vector<256x64xbf16>
    %c0_22 = arith.constant 0 : index
    %c0_23 = arith.constant 0 : index
    %47 = vector.load %arg6[%c0_22, %c0_23] : memref<64x64xbf16, #tpu.memory_space<vmem>>, vector<64x64xbf16>
    %cst_24 = arith.constant dense<0.000000e+00> : vector<256x64xf32>
    %48 = tpu.matmul %46, %47, %cst_24 {dimension_numbers = #tpu.dot_dimension_numbers<[1], [0], [0], [1], [0, 0, 1, 1], [], []>} : vector<256x64xbf16>, vector<64x64xbf16>, vector<256x64xf32> -> vector<256x64xf32>
    %49 = vector.extract_strided_slice %0 {offsets = [4, 0], sizes = [1, 64], strides = [1, 1]} : vector<8x128xf32> to vector<1x64xf32>
    %50 = vector.broadcast %49 : vector<1x64xf32> to vector<256x64xf32>
    %51 = arith.addf %48, %50 : vector<256x64xf32>
    %cst_25 = arith.constant 0.000000e+00 : f32
    %52 = vector.broadcast %cst_25 : f32 to vector<256x64xf32>
    %53 = arith.cmpf ogt, %51, %52 : vector<256x64xf32>
    %cst_26 = arith.constant 0.00999999977 : f32
    %54 = vector.broadcast %cst_26 : f32 to vector<256x64xf32>
    %55 = arith.mulf %54, %51 : vector<256x64xf32>
    %56 = arith.select %53, %51, %55 : vector<256x64xi1>, vector<256x64xf32>
    %57 = arith.truncf %56 : vector<256x64xf32> to vector<256x64xbf16>
    %c0_27 = arith.constant 0 : index
    %c0_28 = arith.constant 0 : index
    %58 = vector.load %arg7[%c0_27, %c0_28] : memref<64x64xbf16, #tpu.memory_space<vmem>>, vector<64x64xbf16>
    %cst_29 = arith.constant dense<0.000000e+00> : vector<256x64xf32>
    %59 = tpu.matmul %57, %58, %cst_29 {dimension_numbers = #tpu.dot_dimension_numbers<[1], [0], [0], [1], [0, 0, 1, 1], [], []>} : vector<256x64xbf16>, vector<64x64xbf16>, vector<256x64xf32> -> vector<256x64xf32>
    %60 = vector.extract_strided_slice %0 {offsets = [5, 0], sizes = [1, 64], strides = [1, 1]} : vector<8x128xf32> to vector<1x64xf32>
    %61 = vector.broadcast %60 : vector<1x64xf32> to vector<256x64xf32>
    %62 = arith.addf %59, %61 : vector<256x64xf32>
    %cst_30 = arith.constant 0.000000e+00 : f32
    %63 = vector.broadcast %cst_30 : f32 to vector<256x64xf32>
    %64 = arith.cmpf ogt, %62, %63 : vector<256x64xf32>
    %cst_31 = arith.constant 0.00999999977 : f32
    %65 = vector.broadcast %cst_31 : f32 to vector<256x64xf32>
    %66 = arith.mulf %65, %62 : vector<256x64xf32>
    %67 = arith.select %64, %62, %66 : vector<256x64xi1>, vector<256x64xf32>
    %68 = vector.extract_strided_slice %0 {offsets = [7, 0], sizes = [1, 64], strides = [1, 1]} : vector<8x128xf32> to vector<1x64xf32>
    %69 = vector.broadcast %68 : vector<1x64xf32> to vector<256x64xf32>
    %70 = arith.mulf %67, %69 : vector<256x64xf32>
    %cst_32 = arith.constant dense<0.000000e+00> : vector<256xf32>
    %71 = vector.multi_reduction <add>, %70, %cst_32 [1] : vector<256x64xf32> to vector<256xf32>
    %72 = vector.shape_cast %71 : vector<256xf32> to vector<256x1xf32>
    %73 = vector.extract_strided_slice %0 {offsets = [6, 0], sizes = [1, 1], strides = [1, 1]} : vector<8x128xf32> to vector<1x1xf32>
    %74 = vector.broadcast %73 : vector<1x1xf32> to vector<256x1xf32>
    %75 = arith.addf %72, %74 : vector<256x1xf32>
    %c0_33 = arith.constant 0 : index
    %c0_34 = arith.constant 0 : index
    %76 = vector.load %arg9[%c0_33, %c0_34] : memref<256x1xf32, #tpu.memory_space<vmem>>, vector<256x1xf32>
    tpu.vector_store %arg9[%c0_33, %c0_34], %75 {strides = array<i32>} : memref<256x1xf32, #tpu.memory_space<vmem>>, vector<256x1xf32>,
    return
  }
  func.func @transform_0(%arg0: i32) -> (i32, i32) {
    %c0_i32 = arith.constant 0 : i32
    %c0_i32_0 = arith.constant 0 : i32
    return %arg0, %c0_i32 : i32, i32
  }
  func.func @transform_1(%arg0: i32) -> (i32, i32) {
    %c0_i32 = arith.constant 0 : i32
    %c0_i32_0 = arith.constant 0 : i32
    %c0_i32_1 = arith.constant 0 : i32
    return %c0_i32, %c0_i32_0 : i32, i32
  }
  func.func @transform_2(%arg0: i32) -> (i32, i32) {
    %c0_i32 = arith.constant 0 : i32
    %c0_i32_0 = arith.constant 0 : i32
    %c0_i32_1 = arith.constant 0 : i32
    return %c0_i32, %c0_i32_0 : i32, i32
  }
  func.func @transform_3(%arg0: i32) -> (i32, i32) {
    %c0_i32 = arith.constant 0 : i32
    %c0_i32_0 = arith.constant 0 : i32
    %c0_i32_1 = arith.constant 0 : i32
    return %c0_i32, %c0_i32_0 : i32, i32
  }
  func.func @transform_4(%arg0: i32) -> (i32, i32) {
    %c0_i32 = arith.constant 0 : i32
    %c0_i32_0 = arith.constant 0 : i32
    %c0_i32_1 = arith.constant 0 : i32
    return %c0_i32, %c0_i32_0 : i32, i32
  }
  func.func @transform_5(%arg0: i32) -> (i32, i32) {
    %c0_i32 = arith.constant 0 : i32
    %c0_i32_0 = arith.constant 0 : i32
    %c0_i32_1 = arith.constant 0 : i32
    return %c0_i32, %c0_i32_0 : i32, i32
  }
  func.func @transform_6(%arg0: i32) -> (i32, i32) {
    %c0_i32 = arith.constant 0 : i32
    %c0_i32_0 = arith.constant 0 : i32
    %c0_i32_1 = arith.constant 0 : i32
    return %c0_i32, %c0_i32_0 : i32, i32
  }
  func.func @transform_7(%arg0: i32) -> (i32, i32) {
    %c0_i32 = arith.constant 0 : i32
    %c0_i32_0 = arith.constant 0 : i32
    %c0_i32_1 = arith.constant 0 : i32
    return %c0_i32, %c0_i32_0 : i32, i32
  }
  func.func @transform_8(%arg0: i32) -> (i32, i32) {
    %c0_i32 = arith.constant 0 : i32
    %c0_i32_0 = arith.constant 0 : i32
    return %arg0, %c0_i32 : i32, i32
  }
}

</mosaic_0001>

<llo_original>
// kernel: regression_nn_forward.1
$region0: #{regression_nn_forward.1}
  #allocation0 [shape = 'u32[]', space=smem, size = 0x4, offset = 0x4, fixed_abs, tag = 'smem constant byte address 0x4 - core index']
  #allocation1 [shape = 'u32[144,128]{1,0:T(1,128)}', space=vmem, size = 0x12000, scoped, tag = 'internal scratch']
  %s0 = inlined_call_operand.vmem [shape: f32[1000,8], index: 0, kind: input, shape index: {}]
  %s1 = inlined_call_operand.vmem [shape: bf16[8,128], index: 1, kind: input, shape index: {}]
  %s2 = inlined_call_operand.vmem [shape: bf16[128,128], index: 2, kind: input, shape index: {}]
  %s3 = inlined_call_operand.vmem [shape: bf16[128,128], index: 3, kind: input, shape index: {}]
  %s4 = inlined_call_operand.vmem [shape: bf16[128,64], index: 4, kind: input, shape index: {}]
  %s5 = inlined_call_operand.vmem [shape: bf16[64,64], index: 5, kind: input, shape index: {}]
  %s6 = inlined_call_operand.vmem [shape: bf16[64,64], index: 6, kind: input, shape index: {}]
  %s7 = inlined_call_operand.vmem [shape: f32[8,128], index: 7, kind: input, shape index: {}]
  %s8 = inlined_call_operand.vmem [shape: f32[1000,1], index: 8, kind: output, shape index: {}]
  %s9 = sld [smem:[#allocation0]]
  $region113: #{regression_nn_forward.1} parent=0
    _
  %s11 = ssub.s32 1, %s9
  %s12 = scalar_select 0, %s11, %s9
  $region1: #{regression_nn_forward.1} parent=0
    #allocation2 [shape = 'u8[262144]{0}', space=vmem, size = 0x40000, scoped, tag = 'output window, operand 0']
    loop: start=0, step=1, limit=6
    $region2: #{regression_nn_forward.1} parent=1 // loop_pre_header
      _
    $region3: #{regression_nn_forward.1} parent=1 // loop_header
      %s14 = sphi 0, %s18
      %p15 = scmp.ge.s32.totalorder %s14, 6
      %s24 = sphi 0, %s26
      %s27 = sphi 0, %s24
      %s28 = sphi 0, %s27
      %s44 = sphi 0, %s28
      %s48 = sphi 0, %s48
      %s50 = sphi 0, %s48
      %s51 = sphi 0, %s50
      %s65 = sphi 0, %s51
      %s69 = sphi 0, %s69
      %s71 = sphi 0, %s69
      %s72 = sphi 0, %s71
      %s86 = sphi 0, %s72
      %s90 = sphi 0, %s90
      %s92 = sphi 0, %s90
      %s93 = sphi 0, %s92
      %s107 = sphi 0, %s93
      %s111 = sphi 0, %s111
      %s113 = sphi 0, %s111
      %s114 = sphi 0, %s113
      %s128 = sphi 0, %s114
      %s132 = sphi 0, %s132
      %s134 = sphi 0, %s132
      %s135 = sphi 0, %s134
      %s149 = sphi 0, %s135
      %s153 = sphi 0, %s153
      %s155 = sphi 0, %s153
      %s156 = sphi 0, %s155
      %s170 = sphi 0, %s156
      %s174 = sphi 0, %s174
      %s176 = sphi 0, %s174
      %s177 = sphi 0, %s176
      %s191 = sphi 0, %s177
      %s197 = sphi 0, %s199
      %s200 = sphi 0, %s197
      %s201 = sphi 0, %s200
      %s217 = sphi 0, %s201
    $region4: #{regression_nn_forward.1} parent=1 // loop_header_branch
      %17 = sbr.rel (%p15) target = $region8
    $region5: #{regression_nn_forward.1} parent=1 // loop_body
      %s19 = ssub.s32 %s14, 1
      %s20 = ssub.s32 %s14, 2
      %s21 = sadd.s32 %s14, 1
      %s22 = ssub.s32 %s14, %s21
      %p23 = scmp.eq.s32.totalorder %s22, 0
      %s25 = sadd.s32 %s24, 1
      %s26 = scalar_select %p23, %s24, %s25
      %p29 = pneg %p23
      %p30 = scmp.eq.s32.totalorder %s14, 3
      %p31 = por %p29, %p30
      %p32 = scmp.ne.s32.totalorder %s24, %s27
      %p33 = scmp.eq.s32.totalorder %s14, 0
      %p34 = por %p32, %p33
      %p35 = scmp.ne.s32.totalorder %s24, %s27
      %p36 = scmp.eq.s32.totalorder %s19, 3
      %p37 = por %p35, %p36
      %p38 = scmp.ne.s32.totalorder %s27, %s28
      %p39 = scmp.eq.s32.totalorder %s19, 0
      %p40 = por %p38, %p39
      %p41 = scmp.ne.s32.totalorder %s27, %s28
      %p42 = scmp.eq.s32.totalorder %s20, 3
      %p43 = por %p41, %p42
      %p45 = scmp.ne.s32.totalorder %s28, %s44
      %p46 = scmp.eq.s32.totalorder %s20, 0
      %p47 = por %p45, %p46
      %s49 = sadd.s32 %s48, 1
      %p52 = scmp.eq.s32.totalorder %s14, 3
      %p53 = scmp.ne.s32.totalorder %s48, %s50
      %p54 = scmp.eq.s32.totalorder %s14, 0
      %p55 = por %p53, %p54
      %p56 = scmp.ne.s32.totalorder %s48, %s50
      %p57 = scmp.eq.s32.totalorder %s19, 3
      %p58 = por %p56, %p57
      %p59 = scmp.ne.s32.totalorder %s50, %s51
      %p60 = scmp.eq.s32.totalorder %s19, 0
      %p61 = por %p59, %p60
      %p62 = scmp.ne.s32.totalorder %s50, %s51
      %p63 = scmp.eq.s32.totalorder %s20, 3
      %p64 = por %p62, %p63
      %p66 = scmp.ne.s32.totalorder %s51, %s65
      %p67 = scmp.eq.s32.totalorder %s20, 0
      %p68 = por %p66, %p67
      %s70 = sadd.s32 %s69, 1
      %p73 = scmp.eq.s32.totalorder %s14, 3
      %p74 = scmp.ne.s32.totalorder %s69, %s71
      %p75 = scmp.eq.s32.totalorder %s14, 0
      %p76 = por %p74, %p75
      %p77 = scmp.ne.s32.totalorder %s69, %s71
      %p78 = scmp.eq.s32.totalorder %s19, 3
      %p79 = por %p77, %p78
      %p80 = scmp.ne.s32.totalorder %s71, %s72
      %p81 = scmp.eq.s32.totalorder %s19, 0
      %p82 = por %p80, %p81
      %p83 = scmp.ne.s32.totalorder %s71, %s72
      %p84 = scmp.eq.s32.totalorder %s20, 3
      %p85 = por %p83, %p84
      %p87 = scmp.ne.s32.totalorder %s72, %s86
      %p88 = scmp.eq.s32.totalorder %s20, 0
      %p89 = por %p87, %p88
      %s91 = sadd.s32 %s90, 1
      %p94 = scmp.eq.s32.totalorder %s14, 3
      %p95 = scmp.ne.s32.totalorder %s90, %s92
      %p96 = scmp.eq.s32.totalorder %s14, 0
      %p97 = por %p95, %p96
      %p98 = scmp.ne.s32.totalorder %s90, %s92
      %p99 = scmp.eq.s32.totalorder %s19, 3
      %p100 = por %p98, %p99
      %p101 = scmp.ne.s32.totalorder %s92, %s93
      %p102 = scmp.eq.s32.totalorder %s19, 0
      %p103 = por %p101, %p102
      %p104 = scmp.ne.s32.totalorder %s92, %s93
      %p105 = scmp.eq.s32.totalorder %s20, 3
      %p106 = por %p104, %p105
      %p108 = scmp.ne.s32.totalorder %s93, %s107
      %p109 = scmp.eq.s32.totalorder %s20, 0
      %p110 = por %p108, %p109
      %s112 = sadd.s32 %s111, 1
      %p115 = scmp.eq.s32.totalorder %s14, 3
      %p116 = scmp.ne.s32.totalorder %s111, %s113
      %p117 = scmp.eq.s32.totalorder %s14, 0
      %p118 = por %p116, %p117
      %p119 = scmp.ne.s32.totalorder %s111, %s113
      %p120 = scmp.eq.s32.totalorder %s19, 3
      %p121 = por %p119, %p120
      %p122 = scmp.ne.s32.totalorder %s113, %s114
      %p123 = scmp.eq.s32.totalorder %s19, 0
      %p124 = por %p122, %p123
      %p125 = scmp.ne.s32.totalorder %s113, %s114
      %p126 = scmp.eq.s32.totalorder %s20, 3
      %p127 = por %p125, %p126
      %p129 = scmp.ne.s32.totalorder %s114, %s128
      %p130 = scmp.eq.s32.totalorder %s20, 0
      %p131 = por %p129, %p130
      %s133 = sadd.s32 %s132, 1
      %p136 = scmp.eq.s32.totalorder %s14, 3
      %p137 = scmp.ne.s32.totalorder %s132, %s134
      %p138 = scmp.eq.s32.totalorder %s14, 0
      %p139 = por %p137, %p138
      %p140 = scmp.ne.s32.totalorder %s132, %s134
      %p141 = scmp.eq.s32.totalorder %s19, 3
      %p142 = por %p140, %p141
      %p143 = scmp.ne.s32.totalorder %s134, %s135
      %p144 = scmp.eq.s32.totalorder %s19, 0
      %p145 = por %p143, %p144
      %p146 = scmp.ne.s32.totalorder %s134, %s135
      %p147 = scmp.eq.s32.totalorder %s20, 3
      %p148 = por %p146, %p147
      %p150 = scmp.ne.s32.totalorder %s135, %s149
      %p151 = scmp.eq.s32.totalorder %s20, 0
      %p152 = por %p150, %p151
      %s154 = sadd.s32 %s153, 1
      %p157 = scmp.eq.s32.totalorder %s14, 3
      %p158 = scmp.ne.s32.totalorder %s153, %s155
      %p159 = scmp.eq.s32.totalorder %s14, 0
      %p160 = por %p158, %p159
      %p161 = scmp.ne.s32.totalorder %s153, %s155
      %p162 = scmp.eq.s32.totalorder %s19, 3
      %p163 = por %p161, %p162
      %p164 = scmp.ne.s32.totalorder %s155, %s156
      %p165 = scmp.eq.s32.totalorder %s19, 0
      %p166 = por %p164, %p165
      %p167 = scmp.ne.s32.totalorder %s155, %s156
      %p168 = scmp.eq.s32.totalorder %s20, 3
      %p169 = por %p167, %p168
      %p171 = scmp.ne.s32.totalorder %s156, %s170
      %p172 = scmp.eq.s32.totalorder %s20, 0
      %p173 = por %p171, %p172
      %s175 = sadd.s32 %s174, 1
      %p178 = scmp.eq.s32.totalorder %s14, 3
      %p179 = scmp.ne.s32.totalorder %s174, %s176
      %p180 = scmp.eq.s32.totalorder %s14, 0
      %p181 = por %p179, %p180
      %p182 = scmp.ne.s32.totalorder %s174, %s176
      %p183 = scmp.eq.s32.totalorder %s19, 3
      %p184 = por %p182, %p183
      %p185 = scmp.ne.s32.totalorder %s176, %s177
      %p186 = scmp.eq.s32.totalorder %s19, 0
      %p187 = por %p185, %p186
      %p188 = scmp.ne.s32.totalorder %s176, %s177
      %p189 = scmp.eq.s32.totalorder %s20, 3
      %p190 = por %p188, %p189
      %p192 = scmp.ne.s32.totalorder %s177, %s191
      %p193 = scmp.eq.s32.totalorder %s20, 0
      %p194 = por %p192, %p193
      %s195 = ssub.s32 %s14, %s21
      %p196 = scmp.eq.s32.totalorder %s195, 0
      %s198 = sadd.s32 %s197, 1
      %s199 = scalar_select %p196, %s197, %s198
      %p202 = pneg %p196
      %p203 = scmp.eq.s32.totalorder %s14, 3
      %p204 = por %p202, %p203
      %p205 = scmp.ne.s32.totalorder %s197, %s200
      %p206 = scmp.eq.s32.totalorder %s14, 0
      %p207 = por %p205, %p206
      %p208 = scmp.ne.s32.totalorder %s197, %s200
      %p209 = scmp.eq.s32.totalorder %s19, 3
      %p210 = por %p208, %p209
      %p211 = scmp.ne.s32.totalorder %s200, %s201
      %p212 = scmp.eq.s32.totalorder %s19, 0
      %p213 = por %p211, %p212
      %p214 = scmp.ne.s32.totalorder %s200, %s201
      %p215 = scmp.eq.s32.totalorder %s20, 3
      %p216 = por %p214, %p215
      %p218 = scmp.ne.s32.totalorder %s201, %s217
      %p219 = scmp.eq.s32.totalorder %s20, 0
      %p220 = por %p218, %p219
      %p221 = scmp.le.s32.totalorder 1, %s14
      %p222 = scmp.lt.s32.totalorder %s14, 5
      %p223 = pnand %p221, %p222
      %p224 = pneg %p223
      // Predicated region
      $region9: #{regression_nn_forward.1} parent=5 // pred_check
        _
      $region10: #{regression_nn_forward.1} parent=5 // pred_check_branch
        %226 = sbr.rel (%p223) target = $region12
      $region11: #{regression_nn_forward.1} parent=5 // pred_region
        %s227 = ssub.s32 %s14, 1
        // Predicated region
        $region13: #{regression_nn_forward.1} parent=11 // pred_check
          %p228 = pneg %p61
        $region14: #{regression_nn_forward.1} parent=11 // pred_check_branch
          %230 = sbr.rel (%p228) target = $region16
        $region15: #{regression_nn_forward.1} parent=11 // pred_region
          _
        $region16: #{regression_nn_forward.1} parent=11 // pred_fallthru
          _
        // Predicated region
        $region17: #{regression_nn_forward.1} parent=11 // pred_check
          %p231 = pneg %p82
        $region18: #{regression_nn_forward.1} parent=11 // pred_check_branch
          %233 = sbr.rel (%p231) target = $region20
        $region19: #{regression_nn_forward.1} parent=11 // pred_region
          _
        $region20: #{regression_nn_forward.1} parent=11 // pred_fallthru
          _
        // Predicated region
        $region21: #{regression_nn_forward.1} parent=11 // pred_check
          %p234 = pneg %p103
        $region22: #{regression_nn_forward.1} parent=11 // pred_check_branch
          %236 = sbr.rel (%p234) target = $region24
        $region23: #{regression_nn_forward.1} parent=11 // pred_region
          _
        $region24: #{regression_nn_forward.1} parent=11 // pred_fallthru
          _
        // Predicated region
        $region25: #{regression_nn_forward.1} parent=11 // pred_check
          %p237 = pneg %p124
        $region26: #{regression_nn_forward.1} parent=11 // pred_check_branch
          %239 = sbr.rel (%p237) target = $region28
        $region27: #{regression_nn_forward.1} parent=11 // pred_region
          _
        $region28: #{regression_nn_forward.1} parent=11 // pred_fallthru
          _
        // Predicated region
        $region29: #{regression_nn_forward.1} parent=11 // pred_check
          %p240 = pneg %p145
        $region30: #{regression_nn_forward.1} parent=11 // pred_check_branch
          %242 = sbr.rel (%p240) target = $region32
        $region31: #{regression_nn_forward.1} parent=11 // pred_region
          _
        $region32: #{regression_nn_forward.1} parent=11 // pred_fallthru
          _
        // Predicated region
        $region33: #{regression_nn_forward.1} parent=11 // pred_check
          %p243 = pneg %p166
        $region34: #{regression_nn_forward.1} parent=11 // pred_check_branch
          %245 = sbr.rel (%p243) target = $region36
        $region35: #{regression_nn_forward.1} parent=11 // pred_region
          _
        $region36: #{regression_nn_forward.1} parent=11 // pred_fallthru
          _
        // Predicated region
        $region37: #{regression_nn_forward.1} parent=11 // pred_check
          %p246 = pneg %p187
        $region38: #{regression_nn_forward.1} parent=11 // pred_check_branch
          %248 = sbr.rel (%p246) target = $region40
        $region39: #{regression_nn_forward.1} parent=11 // pred_region
          _
        $region40: #{regression_nn_forward.1} parent=11 // pred_fallthru
          _
      $region12: #{regression_nn_forward.1} parent=5 // pred_fallthru
        _
      %p249 = scmp.lt.s32.totalorder %s14, 4
      // Predicated region
      $region41: #{regression_nn_forward.1} parent=5 // pred_check
        %p250 = pneg %p249
      $region42: #{regression_nn_forward.1} parent=5 // pred_check_branch
        %252 = sbr.rel (%p250) target = $region44
      $region43: #{regression_nn_forward.1} parent=5 // pred_region
        // Predicated region
        $region45: #{regression_nn_forward.1} parent=43 // pred_check
          %p253 = pneg %p34
        $region46: #{regression_nn_forward.1} parent=43 // pred_check_branch
          %255 = sbr.rel (%p253) target = $region48
        $region47: #{regression_nn_forward.1} parent=43 // pred_region
          %s256 = smul.u32 32, %s14
          %s257 = ssub.s32 125, %s256
          %p258 = scmp.lt.s32.totalorder %s257, 32
          %s259 = scalar_select %p258, %s257, 32
          %s260 = smul.u32 128, %s259
          %p261 = scmp.lt.s32.totalorder %s256, 124
          %s262 = scalar_select %p261, %s256, 124
          %s263 = smul.addr %s262, 8
          %s264 = scalar_lea.vmem %s0, %s263
          %s265 = smul.u32 32, %s14
          %s266 = ssub.s32 125, %s265
          %p267 = scmp.lt.s32.totalorder %s266, 32
          %s268 = scalar_select %p267, %s266, 32
          %s269 = smul.u32 128, %s268
        $region48: #{regression_nn_forward.1} parent=43 // pred_fallthru
          _
      $region44: #{regression_nn_forward.1} parent=5 // pred_fallthru
        _
      %p270 = scmp.le.s32.totalorder 1, %s14
      %p271 = scmp.lt.s32.totalorder %s14, 5
      %p272 = pnand %p270, %p271
      %p273 = pneg %p272
      // Predicated region
      $region49: #{regression_nn_forward.1} parent=5 // pred_check
        _
      $region50: #{regression_nn_forward.1} parent=5 // pred_check_branch
        %275 = sbr.rel (%p272) target = $region52
      $region51: #{regression_nn_forward.1} parent=5 // pred_region
        %s276 = ssub.s32 %s14, 1
        %s277 = smul.u32 32, %s19
        %s278 = ssub.s32 125, %s277
        %p279 = scmp.lt.s32.totalorder %s278, 32
        %s280 = scalar_select %p279, %s278, 32
        %s281 = smul.u32 128, %s280
        %p282 = scmp.lt.s32.totalorder %s277, 124
        %s283 = scalar_select %p282, %s277, 124
        %s284 = smul.addr %s283, 8
        %s285 = scalar_lea.vmem %s0, %s284
        %p286 = pneg %p40
        %p287 = pneg %p37
        %p288 = pneg %p61
        %p289 = pneg %p58
        %p290 = pneg %p82
        %p291 = pneg %p79
        %p292 = pneg %p103
        %p293 = pneg %p100
        %p294 = pneg %p124
        %p295 = pneg %p121
        %p296 = pneg %p145
        %p297 = pneg %p142
        %p298 = pneg %p166
        %p299 = pneg %p163
        %p300 = pneg %p187
        %p301 = pneg %p184
        %p302 = pneg %p213
        %p303 = pneg %p210
        %s304 = sand.u32 %s200, 1
        %s305 = sand.u32 %s200, 1
        %s306 = smul.addr %s305, 256
        %s307 = scalar_lea.vmem [#allocation2], %s306
        %s308 = smul.u32 32, %s19
        %s309 = ssub.s32 125, %s308
        %p310 = scmp.lt.s32.totalorder %s309, 32
        %s311 = scalar_select %p310, %s309, 32
        %s312 = smul.u32 128, %s311
        %p313 = scmp.lt.s32.totalorder %s308, 124
        %s314 = scalar_select %p313, %s308, 124
        %s315 = smul.addr %s314, 8
        %s316 = scalar_lea.vmem %s0, %s315
        %s317 = smul.u32 32, %s19
        %s318 = ssub.s32 125, %s317
        %p319 = scmp.lt.s32.totalorder %s318, 32
        %s320 = scalar_select %p319, %s318, 32
        %s321 = smul.u32 128, %s320
        %s322 = smul.u32 32, %s19
        %s323 = ssub.s32 125, %s322
        %p324 = scmp.lt.s32.totalorder %s323, 32
        %s325 = scalar_select %p324, %s323, 32
        %s326 = smul.u32 128, %s325
        %v328 = vld [vmem:[%s7] sm:$0xff]
        %v329 = vld [vmem:[%s316] sm:$0xff]
        %v330 = vld [vmem:[%s316 + $0x8] sm:$0xff]
        %v331 = vld [vmem:[%s316 + $0x10] sm:$0xff]
        %v332 = vld [vmem:[%s316 + $0x18] sm:$0xff]
        %v333 = vld [vmem:[%s316 + $0x20] sm:$0xff]
        %v334 = vld [vmem:[%s316 + $0x28] sm:$0xff]
        %v335 = vld [vmem:[%s316 + $0x30] sm:$0xff]
        %v336 = vld [vmem:[%s316 + $0x38] sm:$0xff]
        %v337 = vld [vmem:[%s316 + $0x40] sm:$0xff]
        %v338 = vld [vmem:[%s316 + $0x48] sm:$0xff]
        %v339 = vld [vmem:[%s316 + $0x50] sm:$0xff]
        %v340 = vld [vmem:[%s316 + $0x58] sm:$0xff]
        %v341 = vld [vmem:[%s316 + $0x60] sm:$0xff]
        %v342 = vld [vmem:[%s316 + $0x68] sm:$0xff]
        %v343 = vld [vmem:[%s316 + $0x70] sm:$0xff]
        %v344 = vld [vmem:[%s316 + $0x78] sm:$0xff]
        %v345 = vld [vmem:[%s316 + $0x80] sm:$0xff]
        %v346 = vld [vmem:[%s316 + $0x88] sm:$0xff]
        %v347 = vld [vmem:[%s316 + $0x90] sm:$0xff]
        %v348 = vld [vmem:[%s316 + $0x98] sm:$0xff]
        %v349 = vld [vmem:[%s316 + $0xa0] sm:$0xff]
        %v350 = vld [vmem:[%s316 + $0xa8] sm:$0xff]
        %v351 = vld [vmem:[%s316 + $0xb0] sm:$0xff]
        %v352 = vld [vmem:[%s316 + $0xb8] sm:$0xff]
        %v353 = vld [vmem:[%s316 + $0xc0] sm:$0xff]
        %v354 = vld [vmem:[%s316 + $0xc8] sm:$0xff]
        %v355 = vld [vmem:[%s316 + $0xd0] sm:$0xff]
        %v356 = vld [vmem:[%s316 + $0xd8] sm:$0xff]
        %v357 = vld [vmem:[%s316 + $0xe0] sm:$0xff]
        %v358 = vld [vmem:[%s316 + $0xe8] sm:$0xff]
        %v359 = vld [vmem:[%s316 + $0xf0] sm:$0xff]
        %v360 = vld [vmem:[%s316 + $0xf8] sm:$0xff]
        %v361 = vpack.c.bf16 %v330, %v329
        %v362 = vpack.c.bf16 %v332, %v331
        %v363 = vpack.c.bf16 %v334, %v333
        %v364 = vpack.c.bf16 %v336, %v335
        %v365 = vpack.c.bf16 %v338, %v337
        %v366 = vpack.c.bf16 %v340, %v339
        %v367 = vpack.c.bf16 %v342, %v341
        %v368 = vpack.c.bf16 %v344, %v343
        %v369 = vpack.c.bf16 %v346, %v345
        %v370 = vpack.c.bf16 %v348, %v347
        %v371 = vpack.c.bf16 %v350, %v349
        %v372 = vpack.c.bf16 %v352, %v351
        %v373 = vpack.c.bf16 %v354, %v353
        %v374 = vpack.c.bf16 %v356, %v355
        %v375 = vpack.c.bf16 %v358, %v357
        %v376 = vpack.c.bf16 %v360, %v359
        %v377 = vld [vmem:[%s1] sm:$0xf]
        %v378 = vlaneseq
        %v379 = vshrl.u32 %v378, 7
        %v380 = vsub.s32 0, %v379
        %v381 = vrot.slane %v328, %v380
        %vm382 = vcmask 64512
        %v384 = vsel %vm382, %v361, 0
        %v387 = vsel %vm382, %v362, 0
        %v390 = vsel %vm382, %v363, 0
        %v393 = vsel %vm382, %v364, 0
        %v396 = vsel %vm382, %v365, 0
        %v399 = vsel %vm382, %v366, 0
        %v402 = vsel %vm382, %v367, 0
        %v405 = vsel %vm382, %v368, 0
        %v408 = vsel %vm382, %v369, 0
        %v411 = vsel %vm382, %v370, 0
        %v414 = vsel %vm382, %v371, 0
        %v417 = vsel %vm382, %v372, 0
        %v420 = vsel %vm382, %v373, 0
        %v423 = vsel %vm382, %v374, 0
        %v426 = vsel %vm382, %v375, 0
        %v429 = vsel %vm382, %v376, 0
        %vm431 = vcmask 1043456
        %v433 = vsel %vm431, %v377, 0
        %435 = vmatprep.subr.bf16.mxu0 0
        %436 = vmatpush1.bf16.msra.mxu0 %v433
        %437 = vmatprep.subr.bf16.mxu0 0
        %438 = vmatpush1.bf16.msra.mxu0 0
        %439 = vmatprep.subr.bf16.mxu0 0
        %440 = vmatpush1.bf16.msra.mxu0 0
        %441 = vmatprep.subr.bf16.mxu0 0
        %442 = vmatpush1.bf16.msra.mxu0 0
        %443 = vmatprep.subr.bf16.mxu0 0
        %444 = vmatpush1.bf16.msra.mxu0 0
        %445 = vmatprep.subr.bf16.mxu0 0
        %446 = vmatpush1.bf16.msra.mxu0 0
        %447 = vmatprep.subr.bf16.mxu0 0
        %448 = vmatpush1.bf16.msra.mxu0 0
        %449 = vmatprep.subr.bf16.mxu0 0
        %450 = vmatpush1.bf16.msra.mxu0 0
        %451 = vmatprep.subr.bf16.mxu0 0
        %452 = vmatpush1.bf16.msra.mxu0 0
        %453 = vmatprep.subr.bf16.mxu0 0
        %454 = vmatpush1.bf16.msra.mxu0 0
        %455 = vmatprep.subr.bf16.mxu0 0
        %456 = vmatpush1.bf16.msra.mxu0 0
        %457 = vmatprep.subr.bf16.mxu0 0
        %458 = vmatpush1.bf16.msra.mxu0 0
        %459 = vmatprep.subr.bf16.mxu0 0
        %460 = vmatpush1.bf16.msra.mxu0 0
        %461 = vmatprep.subr.bf16.mxu0 0
        %462 = vmatpush1.bf16.msra.mxu0 0
        %463 = vmatprep.subr.bf16.mxu0 0
        %464 = vmatpush1.bf16.msra.mxu0 0
        %465 = vmatprep.subr.bf16.mxu0 0
        %466 = vmatpush1.bf16.msra.mxu0 0
        %467 = vmatprep.mubr.bf16.mxu0 0
        %468 = vmatmul.mubr.bf16.gmra.mrb[0].mxu0 %v384
        %v469 = vpop.f32.mrb[0].mxu0
        %v470 = vadd.f32 %v381, %v469
        %v471 = vpop.f32.mrb[0].mxu0
        %v472 = vpop.f32.mrb[0].mxu0
        %v473 = vadd.f32 %v381, %v472
        %v474 = vpop.f32.mrb[0].mxu0
        %475 = vmatprep.mubr.bf16.mxu0 0
        %476 = vmatmul.mubr.bf16.gmra.mrb[0].mxu0 %v387
        %v477 = vpop.f32.mrb[0].mxu0
        %v478 = vadd.f32 %v381, %v477
        %v479 = vpop.f32.mrb[0].mxu0
        %v480 = vpop.f32.mrb[0].mxu0
        %v481 = vadd.f32 %v381, %v480
        %v482 = vpop.f32.mrb[0].mxu0
        %483 = vmatprep.mubr.bf16.mxu0 0
        %484 = vmatmul.mubr.bf16.gmra.mrb[0].mxu0 %v390
        %v485 = vpop.f32.mrb[0].mxu0
        %v486 = vadd.f32 %v381, %v485
        %v487 = vpop.f32.mrb[0].mxu0
        %v488 = vpop.f32.mrb[0].mxu0
        %v489 = vadd.f32 %v381, %v488
        %v490 = vpop.f32.mrb[0].mxu0
        %491 = vmatprep.mubr.bf16.mxu0 0
        %492 = vmatmul.mubr.bf16.gmra.mrb[0].mxu0 %v393
        %v493 = vpop.f32.mrb[0].mxu0
        %v494 = vadd.f32 %v381, %v493
        %v495 = vpop.f32.mrb[0].mxu0
        %v496 = vpop.f32.mrb[0].mxu0
        %v497 = vadd.f32 %v381, %v496
        %v498 = vpop.f32.mrb[0].mxu0
        %499 = vmatprep.mubr.bf16.mxu0 0
        %500 = vmatmul.mubr.bf16.gmra.mrb[0].mxu0 %v396
        %v501 = vpop.f32.mrb[0].mxu0
        %v502 = vadd.f32 %v381, %v501
        %v503 = vpop.f32.mrb[0].mxu0
        %v504 = vpop.f32.mrb[0].mxu0
        %v505 = vadd.f32 %v381, %v504
        %v506 = vpop.f32.mrb[0].mxu0
        %507 = vmatprep.mubr.bf16.mxu0 0
        %508 = vmatmul.mubr.bf16.gmra.mrb[0].mxu0 %v399
        %v509 = vpop.f32.mrb[0].mxu0
        %v510 = vadd.f32 %v381, %v509
        %v511 = vpop.f32.mrb[0].mxu0
        %v512 = vpop.f32.mrb[0].mxu0
        %v513 = vadd.f32 %v381, %v512
        %v514 = vpop.f32.mrb[0].mxu0
        %515 = vmatprep.mubr.bf16.mxu0 0
        %516 = vmatmul.mubr.bf16.gmra.mrb[0].mxu0 %v402
        %v517 = vpop.f32.mrb[0].mxu0
        %v518 = vadd.f32 %v381, %v517
        %v519 = vpop.f32.mrb[0].mxu0
        %v520 = vpop.f32.mrb[0].mxu0
        %v521 = vadd.f32 %v381, %v520
        %v522 = vpop.f32.mrb[0].mxu0
        %523 = vmatprep.mubr.bf16.mxu0 0
        %524 = vmatmul.mubr.bf16.gmra.mrb[0].mxu0 %v405
        %v525 = vpop.f32.mrb[0].mxu0
        %v526 = vadd.f32 %v381, %v525
        %v527 = vpop.f32.mrb[0].mxu0
        %v528 = vpop.f32.mrb[0].mxu0
        %v529 = vadd.f32 %v381, %v528
        %v530 = vpop.f32.mrb[0].mxu0
        %531 = vmatprep.mubr.bf16.mxu0 0
        %532 = vmatmul.mubr.bf16.gmra.mrb[0].mxu0 %v408
        %v533 = vpop.f32.mrb[0].mxu0
        %v534 = vadd.f32 %v381, %v533
        %v535 = vpop.f32.mrb[0].mxu0
        %v536 = vpop.f32.mrb[0].mxu0
        %v537 = vadd.f32 %v381, %v536
        %v538 = vpop.f32.mrb[0].mxu0
        %539 = vmatprep.mubr.bf16.mxu0 0
        %540 = vmatmul.mubr.bf16.gmra.mrb[0].mxu0 %v411
        %v541 = vpop.f32.mrb[0].mxu0
        %v542 = vadd.f32 %v381, %v541
        %v543 = vpop.f32.mrb[0].mxu0
        %v544 = vpop.f32.mrb[0].mxu0
        %v545 = vadd.f32 %v381, %v544
        %v546 = vpop.f32.mrb[0].mxu0
        %547 = vmatprep.mubr.bf16.mxu0 0
        %548 = vmatmul.mubr.bf16.gmra.mrb[0].mxu0 %v414
        %v549 = vpop.f32.mrb[0].mxu0
        %v550 = vadd.f32 %v381, %v549
        %v551 = vpop.f32.mrb[0].mxu0
        %v552 = vpop.f32.mrb[0].mxu0
        %v553 = vadd.f32 %v381, %v552
        %v554 = vpop.f32.mrb[0].mxu0
        %555 = vmatprep.mubr.bf16.mxu0 0
        %556 = vmatmul.mubr.bf16.gmra.mrb[0].mxu0 %v417
        %v557 = vpop.f32.mrb[0].mxu0
        %v558 = vadd.f32 %v381, %v557
        %v559 = vpop.f32.mrb[0].mxu0
        %v560 = vpop.f32.mrb[0].mxu0
        %v561 = vadd.f32 %v381, %v560
        %v562 = vpop.f32.mrb[0].mxu0
        %563 = vmatprep.mubr.bf16.mxu0 0
        %564 = vmatmul.mubr.bf16.gmra.mrb[0].mxu0 %v420
        %v565 = vpop.f32.mrb[0].mxu0
        %v566 = vadd.f32 %v381, %v565
        %v567 = vpop.f32.mrb[0].mxu0
        %v568 = vpop.f32.mrb[0].mxu0
        %v569 = vadd.f32 %v381, %v568
        %v570 = vpop.f32.mrb[0].mxu0
        %571 = vmatprep.mubr.bf16.mxu0 0
        %572 = vmatmul.mubr.bf16.gmra.mrb[0].mxu0 %v423
        %v573 = vpop.f32.mrb[0].mxu0
        %v574 = vadd.f32 %v381, %v573
        %v575 = vpop.f32.mrb[0].mxu0
        %v576 = vpop.f32.mrb[0].mxu0
        %v577 = vadd.f32 %v381, %v576
        %v578 = vpop.f32.mrb[0].mxu0
        %579 = vmatprep.mubr.bf16.mxu0 0
        %580 = vmatmul.mubr.bf16.gmra.mrb[0].mxu0 %v426
        %v581 = vpop.f32.mrb[0].mxu0
        %v582 = vadd.f32 %v381, %v581
        %v583 = vpop.f32.mrb[0].mxu0
        %v584 = vpop.f32.mrb[0].mxu0
        %v585 = vadd.f32 %v381, %v584
        %v586 = vpop.f32.mrb[0].mxu0
        %587 = vmatprep.mubr.bf16.mxu0 0
        %588 = vmatmul.mubr.bf16.gmra.mrb[0].mxu0 %v429
        %v589 = vpop.f32.mrb[0].mxu0
        %v590 = vadd.f32 %v381, %v589
        %v591 = vpop.f32.mrb[0].mxu0
        %v592 = vpop.f32.mrb[0].mxu0
        %v593 = vadd.f32 %v381, %v592
        %v594 = vpop.f32.mrb[0].mxu0
        %595 = vdwg.mxu0
        %vm596 = vcmp.gt.f32.partialorder %v470, 0.0
        %vm597 = vcmp.gt.f32.partialorder %v473, 0.0
        %vm598 = vcmp.gt.f32.partialorder %v478, 0.0
        %vm599 = vcmp.gt.f32.partialorder %v481, 0.0
        %vm600 = vcmp.gt.f32.partialorder %v486, 0.0
        %vm601 = vcmp.gt.f32.partialorder %v489, 0.0
        %vm602 = vcmp.gt.f32.partialorder %v494, 0.0
        %vm603 = vcmp.gt.f32.partialorder %v497, 0.0
        %vm604 = vcmp.gt.f32.partialorder %v502, 0.0
        %vm605 = vcmp.gt.f32.partialorder %v505, 0.0
        %vm606 = vcmp.gt.f32.partialorder %v510, 0.0
        %vm607 = vcmp.gt.f32.partialorder %v513, 0.0
        %vm608 = vcmp.gt.f32.partialorder %v518, 0.0
        %vm609 = vcmp.gt.f32.partialorder %v521, 0.0
        %vm610 = vcmp.gt.f32.partialorder %v526, 0.0
        %vm611 = vcmp.gt.f32.partialorder %v529, 0.0
        %vm612 = vcmp.gt.f32.partialorder %v534, 0.0
        %vm613 = vcmp.gt.f32.partialorder %v537, 0.0
        %vm614 = vcmp.gt.f32.partialorder %v542, 0.0
        %vm615 = vcmp.gt.f32.partialorder %v545, 0.0
        %vm616 = vcmp.gt.f32.partialorder %v550, 0.0
        %vm617 = vcmp.gt.f32.partialorder %v553, 0.0
        %vm618 = vcmp.gt.f32.partialorder %v558, 0.0
        %vm619 = vcmp.gt.f32.partialorder %v561, 0.0
        %vm620 = vcmp.gt.f32.partialorder %v566, 0.0
        %vm621 = vcmp.gt.f32.partialorder %v569, 0.0
        %vm622 = vcmp.gt.f32.partialorder %v574, 0.0
        %vm623 = vcmp.gt.f32.partialorder %v577, 0.0
        %vm624 = vcmp.gt.f32.partialorder %v582, 0.0
        %vm625 = vcmp.gt.f32.partialorder %v585, 0.0
        %vm626 = vcmp.gt.f32.partialorder %v590, 0.0
        %vm627 = vcmp.gt.f32.partialorder %v593, 0.0
        %v628 = vmul.f32 %v470, 0.01
        %v629 = vmul.f32 %v473, 0.01
        %v630 = vmul.f32 %v478, 0.01
        %v631 = vmul.f32 %v481, 0.01
        %v632 = vmul.f32 %v486, 0.01
        %v633 = vmul.f32 %v489, 0.01
        %v634 = vmul.f32 %v494, 0.01
        %v635 = vmul.f32 %v497, 0.01
        %v636 = vmul.f32 %v502, 0.01
        %v637 = vmul.f32 %v505, 0.01
        %v638 = vmul.f32 %v510, 0.01
        %v639 = vmul.f32 %v513, 0.01
        %v640 = vmul.f32 %v518, 0.01
        %v641 = vmul.f32 %v521, 0.01
        %v642 = vmul.f32 %v526, 0.01
        %v643 = vmul.f32 %v529, 0.01
        %v644 = vmul.f32 %v534, 0.01
        %v645 = vmul.f32 %v537, 0.01
        %v646 = vmul.f32 %v542, 0.01
        %v647 = vmul.f32 %v545, 0.01
        %v648 = vmul.f32 %v550, 0.01
        %v649 = vmul.f32 %v553, 0.01
        %v650 = vmul.f32 %v558, 0.01
        %v651 = vmul.f32 %v561, 0.01
        %v652 = vmul.f32 %v566, 0.01
        %v653 = vmul.f32 %v569, 0.01
        %v654 = vmul.f32 %v574, 0.01
        %v655 = vmul.f32 %v577, 0.01
        %v656 = vmul.f32 %v582, 0.01
        %v657 = vmul.f32 %v585, 0.01
        %v658 = vmul.f32 %v590, 0.01
        %v659 = vmul.f32 %v593, 0.01
        %v660 = vsel %vm596, %v470, %v628
        %v661 = vsel %vm597, %v473, %v629
        %v662 = vsel %vm598, %v478, %v630
        %v663 = vsel %vm599, %v481, %v631
        %v664 = vsel %vm600, %v486, %v632
        %v665 = vsel %vm601, %v489, %v633
        %v666 = vsel %vm602, %v494, %v634
        %v667 = vsel %vm603, %v497, %v635
        %v668 = vsel %vm604, %v502, %v636
        %v669 = vsel %vm605, %v505, %v637
        %v670 = vsel %vm606, %v510, %v638
        %v671 = vsel %vm607, %v513, %v639
        %v672 = vsel %vm608, %v518, %v640
        %v673 = vsel %vm609, %v521, %v641
        %v674 = vsel %vm610, %v526, %v642
        %v675 = vsel %vm611, %v529, %v643
        %v676 = vsel %vm612, %v534, %v644
        %v677 = vsel %vm613, %v537, %v645
        %v678 = vsel %vm614, %v542, %v646
        %v679 = vsel %vm615, %v545, %v647
        %v680 = vsel %vm616, %v550, %v648
        %v681 = vsel %vm617, %v553, %v649
        %v682 = vsel %vm618, %v558, %v650
        %v683 = vsel %vm619, %v561, %v651
        %v684 = vsel %vm620, %v566, %v652
        %v685 = vsel %vm621, %v569, %v653
        %v686 = vsel %vm622, %v574, %v654
        %v687 = vsel %vm623, %v577, %v655
        %v688 = vsel %vm624, %v582, %v656
        %v689 = vsel %vm625, %v585, %v657
        %v690 = vsel %vm626, %v590, %v658
        %v691 = vsel %vm627, %v593, %v659
        %v692 = vpack.c.bf16 %v661, %v660
        %v693 = vpack.c.bf16 %v663, %v662
        %v694 = vpack.c.bf16 %v665, %v664
        %v695 = vpack.c.bf16 %v667, %v666
        %v696 = vpack.c.bf16 %v669, %v668
        %v697 = vpack.c.bf16 %v671, %v670
        %v698 = vpack.c.bf16 %v673, %v672
        %v699 = vpack.c.bf16 %v675, %v674
        %v700 = vpack.c.bf16 %v677, %v676
        %v701 = vpack.c.bf16 %v679, %v678
        %v702 = vpack.c.bf16 %v681, %v680
        %v703 = vpack.c.bf16 %v683, %v682
        %v704 = vpack.c.bf16 %v685, %v684
        %v705 = vpack.c.bf16 %v687, %v686
        %v706 = vpack.c.bf16 %v689, %v688
        %v707 = vpack.c.bf16 %v691, %v690
        %v708 = vld [vmem:[%s2] sm:$0xf]
        %v709 = vld [vmem:[%s2 + $0x4] sm:$0xf]
        %v710 = vld [vmem:[%s2 + $0x8] sm:$0xf]
        %v711 = vld [vmem:[%s2 + $0xc] sm:$0xf]
        %v712 = vld [vmem:[%s2 + $0x10] sm:$0xf]
        %v713 = vld [vmem:[%s2 + $0x14] sm:$0xf]
        %v714 = vld [vmem:[%s2 + $0x18] sm:$0xf]
        %v715 = vld [vmem:[%s2 + $0x1c] sm:$0xf]
        %v716 = vld [vmem:[%s2 + $0x20] sm:$0xf]
        %v717 = vld [vmem:[%s2 + $0x24] sm:$0xf]
        %v718 = vld [vmem:[%s2 + $0x28] sm:$0xf]
        %v719 = vld [vmem:[%s2 + $0x2c] sm:$0xf]
        %v720 = vld [vmem:[%s2 + $0x30] sm:$0xf]
        %v721 = vld [vmem:[%s2 + $0x34] sm:$0xf]
        %v722 = vld [vmem:[%s2 + $0x38] sm:$0xf]
        %v723 = vld [vmem:[%s2 + $0x3c] sm:$0xf]
        %v724 = vlaneseq
        %v725 = vshrl.u32 %v724, 7
        %v726 = vsub.s32 1, %v725
        %v727 = vrot.slane %v328, %v726
        %v744 = vunpack.c.l.b16 %v708
        %v745 = vunpack.c.l.b16 %v709
        %v746 = vunpack.c.l.b16 %v710
        %v747 = vunpack.c.l.b16 %v711
        %v748 = vunpack.c.l.b16 %v712
        %v749 = vunpack.c.l.b16 %v713
        %v750 = vunpack.c.l.b16 %v714
        %v751 = vunpack.c.l.b16 %v715
        %v752 = vunpack.c.l.b16 %v716
        %v753 = vunpack.c.l.b16 %v717
        %v754 = vunpack.c.l.b16 %v718
        %v755 = vunpack.c.l.b16 %v719
        %v756 = vunpack.c.l.b16 %v720
        %v757 = vunpack.c.l.b16 %v721
        %v758 = vunpack.c.l.b16 %v722
        %v759 = vunpack.c.l.b16 %v723
        %v760 = vpack.c.b16 %v745, %v744
        %v761 = vpack.c.b16 %v747, %v746
        %v762 = vpack.c.b16 %v749, %v748
        %v763 = vpack.c.b16 %v751, %v750
        %v764 = vpack.c.b16 %v753, %v752
        %v765 = vpack.c.b16 %v755, %v754
        %v766 = vpack.c.b16 %v757, %v756
        %v767 = vpack.c.b16 %v759, %v758
        %776 = vmatprep.subr.bf16.mxu0 0
        %777 = vmatpush1.bf16.msra.mxu0 %v760
        %778 = vmatprep.subr.bf16.mxu0 0
        %779 = vmatpush1.bf16.msra.mxu0 %v761
        %780 = vmatprep.subr.bf16.mxu0 0
        %781 = vmatpush1.bf16.msra.mxu0 %v762
        %782 = vmatprep.subr.bf16.mxu0 0
        %783 = vmatpush1.bf16.msra.mxu0 %v763
        %784 = vmatprep.subr.bf16.mxu0 0
        %785 = vmatpush1.bf16.msra.mxu0 %v764
        %786 = vmatprep.subr.bf16.mxu0 0
        %787 = vmatpush1.bf16.msra.mxu0 %v765
        %788 = vmatprep.subr.bf16.mxu0 0
        %789 = vmatpush1.bf16.msra.mxu0 %v766
        %790 = vmatprep.subr.bf16.mxu0 0
        %791 = vmatpush1.bf16.msra.mxu0 %v767
        %792 = vmatprep.subr.bf16.mxu0 0
        %793 = vmatpush1.bf16.msra.mxu0 0
        %794 = vmatprep.subr.bf16.mxu0 0
        %795 = vmatpush1.bf16.msra.mxu0 0
        %796 = vmatprep.subr.bf16.mxu0 0
        %797 = vmatpush1.bf16.msra.mxu0 0
        %798 = vmatprep.subr.bf16.mxu0 0
        %799 = vmatpush1.bf16.msra.mxu0 0
        %800 = vmatprep.subr.bf16.mxu0 0
        %801 = vmatpush1.bf16.msra.mxu0 0
        %802 = vmatprep.subr.bf16.mxu0 0
        %803 = vmatpush1.bf16.msra.mxu0 0
        %804 = vmatprep.subr.bf16.mxu0 0
        %805 = vmatpush1.bf16.msra.mxu0 0
        %806 = vmatprep.subr.bf16.mxu0 0
        %807 = vmatpush1.bf16.msra.mxu0 0
        %808 = vmatprep.mubr.bf16.mxu0 0
        %809 = vmatmul.mubr.bf16.gmra.mrb[0].mxu0 %v692
        %v810 = vpop.f32.mrb[0].mxu0
        %v811 = vadd.f32 %v727, %v810
        %v812 = vpop.f32.mrb[0].mxu0
        %v813 = vpop.f32.mrb[0].mxu0
        %v814 = vadd.f32 %v727, %v813
        %v815 = vpop.f32.mrb[0].mxu0
        %816 = vmatprep.mubr.bf16.mxu0 0
        %817 = vmatmul.mubr.bf16.gmra.mrb[0].mxu0 %v693
        %v818 = vpop.f32.mrb[0].mxu0
        %v819 = vadd.f32 %v727, %v818
        %v820 = vpop.f32.mrb[0].mxu0
        %v821 = vpop.f32.mrb[0].mxu0
        %v822 = vadd.f32 %v727, %v821
        %v823 = vpop.f32.mrb[0].mxu0
        %824 = vmatprep.mubr.bf16.mxu0 0
        %825 = vmatmul.mubr.bf16.gmra.mrb[0].mxu0 %v694
        %v826 = vpop.f32.mrb[0].mxu0
        %v827 = vadd.f32 %v727, %v826
        %v828 = vpop.f32.mrb[0].mxu0
        %v829 = vpop.f32.mrb[0].mxu0
        %v830 = vadd.f32 %v727, %v829
        %v831 = vpop.f32.mrb[0].mxu0
        %832 = vmatprep.mubr.bf16.mxu0 0
        %833 = vmatmul.mubr.bf16.gmra.mrb[0].mxu0 %v695
        %v834 = vpop.f32.mrb[0].mxu0
        %v835 = vadd.f32 %v727, %v834
        %v836 = vpop.f32.mrb[0].mxu0
        %v837 = vpop.f32.mrb[0].mxu0
        %v838 = vadd.f32 %v727, %v837
        %v839 = vpop.f32.mrb[0].mxu0
        %840 = vmatprep.mubr.bf16.mxu0 0
        %841 = vmatmul.mubr.bf16.gmra.mrb[0].mxu0 %v696
        %v842 = vpop.f32.mrb[0].mxu0
        %v843 = vadd.f32 %v727, %v842
        %v844 = vpop.f32.mrb[0].mxu0
        %v845 = vpop.f32.mrb[0].mxu0
        %v846 = vadd.f32 %v727, %v845
        %v847 = vpop.f32.mrb[0].mxu0
        %848 = vmatprep.mubr.bf16.mxu0 0
        %849 = vmatmul.mubr.bf16.gmra.mrb[0].mxu0 %v697
        %v850 = vpop.f32.mrb[0].mxu0
        %v851 = vadd.f32 %v727, %v850
        %v852 = vpop.f32.mrb[0].mxu0
        %v853 = vpop.f32.mrb[0].mxu0
        %v854 = vadd.f32 %v727, %v853
        %v855 = vpop.f32.mrb[0].mxu0
        %856 = vmatprep.mubr.bf16.mxu0 0
        %857 = vmatmul.mubr.bf16.gmra.mrb[0].mxu0 %v698
        %v858 = vpop.f32.mrb[0].mxu0
        %v859 = vadd.f32 %v727, %v858
        %v860 = vpop.f32.mrb[0].mxu0
        %v861 = vpop.f32.mrb[0].mxu0
        %v862 = vadd.f32 %v727, %v861
        %v863 = vpop.f32.mrb[0].mxu0
        %864 = vmatprep.mubr.bf16.mxu0 0
        %865 = vmatmul.mubr.bf16.gmra.mrb[0].mxu0 %v699
        %v866 = vpop.f32.mrb[0].mxu0
        %v867 = vadd.f32 %v727, %v866
        %v868 = vpop.f32.mrb[0].mxu0
        %v869 = vpop.f32.mrb[0].mxu0
        %v870 = vadd.f32 %v727, %v869
        %v871 = vpop.f32.mrb[0].mxu0
        %872 = vmatprep.mubr.bf16.mxu0 0
        %873 = vmatmul.mubr.bf16.gmra.mrb[0].mxu0 %v700
        %v874 = vpop.f32.mrb[0].mxu0
        %v875 = vadd.f32 %v727, %v874
        %v876 = vpop.f32.mrb[0].mxu0
        %v877 = vpop.f32.mrb[0].mxu0
        %v878 = vadd.f32 %v727, %v877
        %v879 = vpop.f32.mrb[0].mxu0
        %880 = vmatprep.mubr.bf16.mxu0 0
        %881 = vmatmul.mubr.bf16.gmra.mrb[0].mxu0 %v701
        %v882 = vpop.f32.mrb[0].mxu0
        %v883 = vadd.f32 %v727, %v882
        %v884 = vpop.f32.mrb[0].mxu0
        %v885 = vpop.f32.mrb[0].mxu0
        %v886 = vadd.f32 %v727, %v885
        %v887 = vpop.f32.mrb[0].mxu0
        %888 = vmatprep.mubr.bf16.mxu0 0
        %889 = vmatmul.mubr.bf16.gmra.mrb[0].mxu0 %v702
        %v890 = vpop.f32.mrb[0].mxu0
        %v891 = vadd.f32 %v727, %v890
        %v892 = vpop.f32.mrb[0].mxu0
        %v893 = vpop.f32.mrb[0].mxu0
        %v894 = vadd.f32 %v727, %v893
        %v895 = vpop.f32.mrb[0].mxu0
        %896 = vmatprep.mubr.bf16.mxu0 0
        %897 = vmatmul.mubr.bf16.gmra.mrb[0].mxu0 %v703
        %v898 = vpop.f32.mrb[0].mxu0
        %v899 = vadd.f32 %v727, %v898
        %v900 = vpop.f32.mrb[0].mxu0
        %v901 = vpop.f32.mrb[0].mxu0
        %v902 = vadd.f32 %v727, %v901
        %v903 = vpop.f32.mrb[0].mxu0
        %904 = vmatprep.mubr.bf16.mxu0 0
        %905 = vmatmul.mubr.bf16.gmra.mrb[0].mxu0 %v704
        %v906 = vpop.f32.mrb[0].mxu0
        %v907 = vadd.f32 %v727, %v906
        %v908 = vpop.f32.mrb[0].mxu0
        %v909 = vpop.f32.mrb[0].mxu0
        %v910 = vadd.f32 %v727, %v909
        %v911 = vpop.f32.mrb[0].mxu0
        %912 = vmatprep.mubr.bf16.mxu0 0
        %913 = vmatmul.mubr.bf16.gmra.mrb[0].mxu0 %v705
        %v914 = vpop.f32.mrb[0].mxu0
        %v915 = vadd.f32 %v727, %v914
        %v916 = vpop.f32.mrb[0].mxu0
        %v917 = vpop.f32.mrb[0].mxu0
        %v918 = vadd.f32 %v727, %v917
        %v919 = vpop.f32.mrb[0].mxu0
        %920 = vmatprep.mubr.bf16.mxu0 0
        %921 = vmatmul.mubr.bf16.gmra.mrb[0].mxu0 %v706
        %v922 = vpop.f32.mrb[0].mxu0
        %v923 = vadd.f32 %v727, %v922
        %v924 = vpop.f32.mrb[0].mxu0
        %v925 = vpop.f32.mrb[0].mxu0
        %v926 = vadd.f32 %v727, %v925
        %v927 = vpop.f32.mrb[0].mxu0
        %928 = vmatprep.mubr.bf16.mxu0 0
        %929 = vmatmul.mubr.bf16.gmra.mrb[0].mxu0 %v707
        %v930 = vpop.f32.mrb[0].mxu0
        %v931 = vadd.f32 %v727, %v930
        %v932 = vpop.f32.mrb[0].mxu0
        %v933 = vpop.f32.mrb[0].mxu0
        %v934 = vadd.f32 %v727, %v933
        %v935 = vpop.f32.mrb[0].mxu0
        %936 = vdwg.mxu0
        %vm937 = vcmp.gt.f32.partialorder %v811, 0.0
        %vm938 = vcmp.gt.f32.partialorder %v814, 0.0
        %vm939 = vcmp.gt.f32.partialorder %v819, 0.0
        %vm940 = vcmp.gt.f32.partialorder %v822, 0.0
        %vm941 = vcmp.gt.f32.partialorder %v827, 0.0
        %vm942 = vcmp.gt.f32.partialorder %v830, 0.0
        %vm943 = vcmp.gt.f32.partialorder %v835, 0.0
        %vm944 = vcmp.gt.f32.partialorder %v838, 0.0
        %vm945 = vcmp.gt.f32.partialorder %v843, 0.0
        %vm946 = vcmp.gt.f32.partialorder %v846, 0.0
        %vm947 = vcmp.gt.f32.partialorder %v851, 0.0
        %vm948 = vcmp.gt.f32.partialorder %v854, 0.0
        %vm949 = vcmp.gt.f32.partialorder %v859, 0.0
        %vm950 = vcmp.gt.f32.partialorder %v862, 0.0
        %vm951 = vcmp.gt.f32.partialorder %v867, 0.0
        %vm952 = vcmp.gt.f32.partialorder %v870, 0.0
        %vm953 = vcmp.gt.f32.partialorder %v875, 0.0
        %vm954 = vcmp.gt.f32.partialorder %v878, 0.0
        %vm955 = vcmp.gt.f32.partialorder %v883, 0.0
        %vm956 = vcmp.gt.f32.partialorder %v886, 0.0
        %vm957 = vcmp.gt.f32.partialorder %v891, 0.0
        %vm958 = vcmp.gt.f32.partialorder %v894, 0.0
        %vm959 = vcmp.gt.f32.partialorder %v899, 0.0
        %vm960 = vcmp.gt.f32.partialorder %v902, 0.0
        %vm961 = vcmp.gt.f32.partialorder %v907, 0.0
        %vm962 = vcmp.gt.f32.partialorder %v910, 0.0
        %vm963 = vcmp.gt.f32.partialorder %v915, 0.0
        %vm964 = vcmp.gt.f32.partialorder %v918, 0.0
        %vm965 = vcmp.gt.f32.partialorder %v923, 0.0
        %vm966 = vcmp.gt.f32.partialorder %v926, 0.0
        %vm967 = vcmp.gt.f32.partialorder %v931, 0.0
        %vm968 = vcmp.gt.f32.partialorder %v934, 0.0
        %v969 = vmul.f32 %v811, 0.01
        %v970 = vmul.f32 %v814, 0.01
        %v971 = vmul.f32 %v819, 0.01
        %v972 = vmul.f32 %v822, 0.01
        %v973 = vmul.f32 %v827, 0.01
        %v974 = vmul.f32 %v830, 0.01
        %v975 = vmul.f32 %v835, 0.01
        %v976 = vmul.f32 %v838, 0.01
        %v977 = vmul.f32 %v843, 0.01
        %v978 = vmul.f32 %v846, 0.01
        %v979 = vmul.f32 %v851, 0.01
        %v980 = vmul.f32 %v854, 0.01
        %v981 = vmul.f32 %v859, 0.01
        %v982 = vmul.f32 %v862, 0.01
        %v983 = vmul.f32 %v867, 0.01
        %v984 = vmul.f32 %v870, 0.01
        %v985 = vmul.f32 %v875, 0.01
        %v986 = vmul.f32 %v878, 0.01
        %v987 = vmul.f32 %v883, 0.01
        %v988 = vmul.f32 %v886, 0.01
        %v989 = vmul.f32 %v891, 0.01
        %v990 = vmul.f32 %v894, 0.01
        %v991 = vmul.f32 %v899, 0.01
        %v992 = vmul.f32 %v902, 0.01
        %v993 = vmul.f32 %v907, 0.01
        %v994 = vmul.f32 %v910, 0.01
        %v995 = vmul.f32 %v915, 0.01
        %v996 = vmul.f32 %v918, 0.01
        %v997 = vmul.f32 %v923, 0.01
        %v998 = vmul.f32 %v926, 0.01
        %v999 = vmul.f32 %v931, 0.01
        %v1000 = vmul.f32 %v934, 0.01
        %v1001 = vsel %vm937, %v811, %v969
        %v1002 = vsel %vm938, %v814, %v970
        %v1003 = vsel %vm939, %v819, %v971
        %v1004 = vsel %vm940, %v822, %v972
        %v1005 = vsel %vm941, %v827, %v973
        %v1006 = vsel %vm942, %v830, %v974
        %v1007 = vsel %vm943, %v835, %v975
        %v1008 = vsel %vm944, %v838, %v976
        %v1009 = vsel %vm945, %v843, %v977
        %v1010 = vsel %vm946, %v846, %v978
        %v1011 = vsel %vm947, %v851, %v979
        %v1012 = vsel %vm948, %v854, %v980
        %v1013 = vsel %vm949, %v859, %v981
        %v1014 = vsel %vm950, %v862, %v982
        %v1015 = vsel %vm951, %v867, %v983
        %v1016 = vsel %vm952, %v870, %v984
        %v1017 = vsel %vm953, %v875, %v985
        %v1018 = vsel %vm954, %v878, %v986
        %v1019 = vsel %vm955, %v883, %v987
        %v1020 = vsel %vm956, %v886, %v988
        %v1021 = vsel %vm957, %v891, %v989
        %v1022 = vsel %vm958, %v894, %v990
        %v1023 = vsel %vm959, %v899, %v991
        %v1024 = vsel %vm960, %v902, %v992
        %v1025 = vsel %vm961, %v907, %v993
        %v1026 = vsel %vm962, %v910, %v994
        %v1027 = vsel %vm963, %v915, %v995
        %v1028 = vsel %vm964, %v918, %v996
        %v1029 = vsel %vm965, %v923, %v997
        %v1030 = vsel %vm966, %v926, %v998
        %v1031 = vsel %vm967, %v931, %v999
        %v1032 = vsel %vm968, %v934, %v1000
        %v1033 = vpack.c.bf16 %v1002, %v1001
        %v1034 = vpack.c.bf16 %v1004, %v1003
        %v1035 = vpack.c.bf16 %v1006, %v1005
        %v1036 = vpack.c.bf16 %v1008, %v1007
        %v1037 = vpack.c.bf16 %v1010, %v1009
        %v1038 = vpack.c.bf16 %v1012, %v1011
        %v1039 = vpack.c.bf16 %v1014, %v1013
        %v1040 = vpack.c.bf16 %v1016, %v1015
        %v1041 = vpack.c.bf16 %v1018, %v1017
        %v1042 = vpack.c.bf16 %v1020, %v1019
        %v1043 = vpack.c.bf16 %v1022, %v1021
        %v1044 = vpack.c.bf16 %v1024, %v1023
        %v1045 = vpack.c.bf16 %v1026, %v1025
        %v1046 = vpack.c.bf16 %v1028, %v1027
        %v1047 = vpack.c.bf16 %v1030, %v1029
        %v1048 = vpack.c.bf16 %v1032, %v1031
        %v1049 = vld [vmem:[%s3] sm:$0xf]
        %v1050 = vld [vmem:[%s3 + $0x4] sm:$0xf]
        %v1051 = vld [vmem:[%s3 + $0x8] sm:$0xf]
        %v1052 = vld [vmem:[%s3 + $0xc] sm:$0xf]
        %v1053 = vld [vmem:[%s3 + $0x10] sm:$0xf]
        %v1054 = vld [vmem:[%s3 + $0x14] sm:$0xf]
        %v1055 = vld [vmem:[%s3 + $0x18] sm:$0xf]
        %v1056 = vld [vmem:[%s3 + $0x1c] sm:$0xf]
        %v1057 = vld [vmem:[%s3 + $0x20] sm:$0xf]
        %v1058 = vld [vmem:[%s3 + $0x24] sm:$0xf]
        %v1059 = vld [vmem:[%s3 + $0x28] sm:$0xf]
        %v1060 = vld [vmem:[%s3 + $0x2c] sm:$0xf]
        %v1061 = vld [vmem:[%s3 + $0x30] sm:$0xf]
        %v1062 = vld [vmem:[%s3 + $0x34] sm:$0xf]
        %v1063 = vld [vmem:[%s3 + $0x38] sm:$0xf]
        %v1064 = vld [vmem:[%s3 + $0x3c] sm:$0xf]
        %v1065 = vlaneseq
        %v1066 = vshrl.u32 %v1065, 7
        %v1067 = vsub.s32 2, %v1066
        %v1068 = vrot.slane %v328, %v1067
        %v1085 = vunpack.c.l.b16 %v1049
        %v1086 = vunpack.c.l.b16 %v1050
        %v1087 = vunpack.c.l.b16 %v1051
        %v1088 = vunpack.c.l.b16 %v1052
        %v1089 = vunpack.c.l.b16 %v1053
        %v1090 = vunpack.c.l.b16 %v1054
        %v1091 = vunpack.c.l.b16 %v1055
        %v1092 = vunpack.c.l.b16 %v1056
        %v1093 = vunpack.c.l.b16 %v1057
        %v1094 = vunpack.c.l.b16 %v1058
        %v1095 = vunpack.c.l.b16 %v1059
        %v1096 = vunpack.c.l.b16 %v1060
        %v1097 = vunpack.c.l.b16 %v1061
        %v1098 = vunpack.c.l.b16 %v1062
        %v1099 = vunpack.c.l.b16 %v1063
        %v1100 = vunpack.c.l.b16 %v1064
        %v1101 = vpack.c.b16 %v1086, %v1085
        %v1102 = vpack.c.b16 %v1088, %v1087
        %v1103 = vpack.c.b16 %v1090, %v1089
        %v1104 = vpack.c.b16 %v1092, %v1091
        %v1105 = vpack.c.b16 %v1094, %v1093
        %v1106 = vpack.c.b16 %v1096, %v1095
        %v1107 = vpack.c.b16 %v1098, %v1097
        %v1108 = vpack.c.b16 %v1100, %v1099
        %1117 = vmatprep.subr.bf16.mxu0 0
        %1118 = vmatpush1.bf16.msra.mxu0 %v1101
        %1119 = vmatprep.subr.bf16.mxu0 0
        %1120 = vmatpush1.bf16.msra.mxu0 %v1102
        %1121 = vmatprep.subr.bf16.mxu0 0
        %1122 = vmatpush1.bf16.msra.mxu0 %v1103
        %1123 = vmatprep.subr.bf16.mxu0 0
        %1124 = vmatpush1.bf16.msra.mxu0 %v1104
        %1125 = vmatprep.subr.bf16.mxu0 0
        %1126 = vmatpush1.bf16.msra.mxu0 %v1105
        %1127 = vmatprep.subr.bf16.mxu0 0
        %1128 = vmatpush1.bf16.msra.mxu0 %v1106
        %1129 = vmatprep.subr.bf16.mxu0 0
        %1130 = vmatpush1.bf16.msra.mxu0 %v1107
        %1131 = vmatprep.subr.bf16.mxu0 0
        %1132 = vmatpush1.bf16.msra.mxu0 %v1108
        %1133 = vmatprep.subr.bf16.mxu0 0
        %1134 = vmatpush1.bf16.msra.mxu0 0
        %1135 = vmatprep.subr.bf16.mxu0 0
        %1136 = vmatpush1.bf16.msra.mxu0 0
        %1137 = vmatprep.subr.bf16.mxu0 0
        %1138 = vmatpush1.bf16.msra.mxu0 0
        %1139 = vmatprep.subr.bf16.mxu0 0
        %1140 = vmatpush1.bf16.msra.mxu0 0
        %1141 = vmatprep.subr.bf16.mxu0 0
        %1142 = vmatpush1.bf16.msra.mxu0 0
        %1143 = vmatprep.subr.bf16.mxu0 0
        %1144 = vmatpush1.bf16.msra.mxu0 0
        %1145 = vmatprep.subr.bf16.mxu0 0
        %1146 = vmatpush1.bf16.msra.mxu0 0
        %1147 = vmatprep.subr.bf16.mxu0 0
        %1148 = vmatpush1.bf16.msra.mxu0 0
        %1149 = vmatprep.mubr.bf16.mxu0 0
        %1150 = vmatmul.mubr.bf16.gmra.mrb[0].mxu0 %v1033
        %v1151 = vpop.f32.mrb[0].mxu0
        %v1152 = vadd.f32 %v1068, %v1151
        %v1153 = vpop.f32.mrb[0].mxu0
        %v1154 = vpop.f32.mrb[0].mxu0
        %v1155 = vadd.f32 %v1068, %v1154
        %v1156 = vpop.f32.mrb[0].mxu0
        %1157 = vmatprep.mubr.bf16.mxu0 0
        %1158 = vmatmul.mubr.bf16.gmra.mrb[0].mxu0 %v1034
        %v1159 = vpop.f32.mrb[0].mxu0
        %v1160 = vadd.f32 %v1068, %v1159
        %v1161 = vpop.f32.mrb[0].mxu0
        %v1162 = vpop.f32.mrb[0].mxu0
        %v1163 = vadd.f32 %v1068, %v1162
        %v1164 = vpop.f32.mrb[0].mxu0
        %1165 = vmatprep.mubr.bf16.mxu0 0
        %1166 = vmatmul.mubr.bf16.gmra.mrb[0].mxu0 %v1035
        %v1167 = vpop.f32.mrb[0].mxu0
        %v1168 = vadd.f32 %v1068, %v1167
        %v1169 = vpop.f32.mrb[0].mxu0
        %v1170 = vpop.f32.mrb[0].mxu0
        %v1171 = vadd.f32 %v1068, %v1170
        %v1172 = vpop.f32.mrb[0].mxu0
        %1173 = vmatprep.mubr.bf16.mxu0 0
        %1174 = vmatmul.mubr.bf16.gmra.mrb[0].mxu0 %v1036
        %v1175 = vpop.f32.mrb[0].mxu0
        %v1176 = vadd.f32 %v1068, %v1175
        %v1177 = vpop.f32.mrb[0].mxu0
        %v1178 = vpop.f32.mrb[0].mxu0
        %v1179 = vadd.f32 %v1068, %v1178
        %v1180 = vpop.f32.mrb[0].mxu0
        %1181 = vmatprep.mubr.bf16.mxu0 0
        %1182 = vmatmul.mubr.bf16.gmra.mrb[0].mxu0 %v1037
        %v1183 = vpop.f32.mrb[0].mxu0
        %v1184 = vadd.f32 %v1068, %v1183
        %v1185 = vpop.f32.mrb[0].mxu0
        %v1186 = vpop.f32.mrb[0].mxu0
        %v1187 = vadd.f32 %v1068, %v1186
        %v1188 = vpop.f32.mrb[0].mxu0
        %1189 = vmatprep.mubr.bf16.mxu0 0
        %1190 = vmatmul.mubr.bf16.gmra.mrb[0].mxu0 %v1038
        %v1191 = vpop.f32.mrb[0].mxu0
        %v1192 = vadd.f32 %v1068, %v1191
        %v1193 = vpop.f32.mrb[0].mxu0
        %v1194 = vpop.f32.mrb[0].mxu0
        %v1195 = vadd.f32 %v1068, %v1194
        %v1196 = vpop.f32.mrb[0].mxu0
        %1197 = vmatprep.mubr.bf16.mxu0 0
        %1198 = vmatmul.mubr.bf16.gmra.mrb[0].mxu0 %v1039
        %v1199 = vpop.f32.mrb[0].mxu0
        %v1200 = vadd.f32 %v1068, %v1199
        %v1201 = vpop.f32.mrb[0].mxu0
        %v1202 = vpop.f32.mrb[0].mxu0
        %v1203 = vadd.f32 %v1068, %v1202
        %v1204 = vpop.f32.mrb[0].mxu0
        %1205 = vmatprep.mubr.bf16.mxu0 0
        %1206 = vmatmul.mubr.bf16.gmra.mrb[0].mxu0 %v1040
        %v1207 = vpop.f32.mrb[0].mxu0
        %v1208 = vadd.f32 %v1068, %v1207
        %v1209 = vpop.f32.mrb[0].mxu0
        %v1210 = vpop.f32.mrb[0].mxu0
        %v1211 = vadd.f32 %v1068, %v1210
        %v1212 = vpop.f32.mrb[0].mxu0
        %1213 = vmatprep.mubr.bf16.mxu0 0
        %1214 = vmatmul.mubr.bf16.gmra.mrb[0].mxu0 %v1041
        %v1215 = vpop.f32.mrb[0].mxu0
        %v1216 = vadd.f32 %v1068, %v1215
        %v1217 = vpop.f32.mrb[0].mxu0
        %v1218 = vpop.f32.mrb[0].mxu0
        %v1219 = vadd.f32 %v1068, %v1218
        %v1220 = vpop.f32.mrb[0].mxu0
        %1221 = vmatprep.mubr.bf16.mxu0 0
        %1222 = vmatmul.mubr.bf16.gmra.mrb[0].mxu0 %v1042
        %v1223 = vpop.f32.mrb[0].mxu0
        %v1224 = vadd.f32 %v1068, %v1223
        %v1225 = vpop.f32.mrb[0].mxu0
        %v1226 = vpop.f32.mrb[0].mxu0
        %v1227 = vadd.f32 %v1068, %v1226
        %v1228 = vpop.f32.mrb[0].mxu0
        %1229 = vmatprep.mubr.bf16.mxu0 0
        %1230 = vmatmul.mubr.bf16.gmra.mrb[0].mxu0 %v1043
        %v1231 = vpop.f32.mrb[0].mxu0
        %v1232 = vadd.f32 %v1068, %v1231
        %v1233 = vpop.f32.mrb[0].mxu0
        %v1234 = vpop.f32.mrb[0].mxu0
        %v1235 = vadd.f32 %v1068, %v1234
        %v1236 = vpop.f32.mrb[0].mxu0
        %1237 = vmatprep.mubr.bf16.mxu0 0
        %1238 = vmatmul.mubr.bf16.gmra.mrb[0].mxu0 %v1044
        %v1239 = vpop.f32.mrb[0].mxu0
        %v1240 = vadd.f32 %v1068, %v1239
        %v1241 = vpop.f32.mrb[0].mxu0
        %v1242 = vpop.f32.mrb[0].mxu0
        %v1243 = vadd.f32 %v1068, %v1242
        %v1244 = vpop.f32.mrb[0].mxu0
        %1245 = vmatprep.mubr.bf16.mxu0 0
        %1246 = vmatmul.mubr.bf16.gmra.mrb[0].mxu0 %v1045
        %v1247 = vpop.f32.mrb[0].mxu0
        %v1248 = vadd.f32 %v1068, %v1247
        %v1249 = vpop.f32.mrb[0].mxu0
        %v1250 = vpop.f32.mrb[0].mxu0
        %v1251 = vadd.f32 %v1068, %v1250
        %v1252 = vpop.f32.mrb[0].mxu0
        %1253 = vmatprep.mubr.bf16.mxu0 0
        %1254 = vmatmul.mubr.bf16.gmra.mrb[0].mxu0 %v1046
        %v1255 = vpop.f32.mrb[0].mxu0
        %v1256 = vadd.f32 %v1068, %v1255
        %v1257 = vpop.f32.mrb[0].mxu0
        %v1258 = vpop.f32.mrb[0].mxu0
        %v1259 = vadd.f32 %v1068, %v1258
        %v1260 = vpop.f32.mrb[0].mxu0
        %1261 = vmatprep.mubr.bf16.mxu0 0
        %1262 = vmatmul.mubr.bf16.gmra.mrb[0].mxu0 %v1047
        %v1263 = vpop.f32.mrb[0].mxu0
        %v1264 = vadd.f32 %v1068, %v1263
        %v1265 = vpop.f32.mrb[0].mxu0
        %v1266 = vpop.f32.mrb[0].mxu0
        %v1267 = vadd.f32 %v1068, %v1266
        %v1268 = vpop.f32.mrb[0].mxu0
        %1269 = vmatprep.mubr.bf16.mxu0 0
        %1270 = vmatmul.mubr.bf16.gmra.mrb[0].mxu0 %v1048
        %v1271 = vpop.f32.mrb[0].mxu0
        %v1272 = vadd.f32 %v1068, %v1271
        %v1273 = vpop.f32.mrb[0].mxu0
        %v1274 = vpop.f32.mrb[0].mxu0
        %v1275 = vadd.f32 %v1068, %v1274
        %v1276 = vpop.f32.mrb[0].mxu0
        %1277 = vdwg.mxu0
        %vm1278 = vcmp.gt.f32.partialorder %v1152, 0.0
        %vm1279 = vcmp.gt.f32.partialorder %v1155, 0.0
        %vm1280 = vcmp.gt.f32.partialorder %v1160, 0.0
        %vm1281 = vcmp.gt.f32.partialorder %v1163, 0.0
        %vm1282 = vcmp.gt.f32.partialorder %v1168, 0.0
        %vm1283 = vcmp.gt.f32.partialorder %v1171, 0.0
        %vm1284 = vcmp.gt.f32.partialorder %v1176, 0.0
        %vm1285 = vcmp.gt.f32.partialorder %v1179, 0.0
        %vm1286 = vcmp.gt.f32.partialorder %v1184, 0.0
        %vm1287 = vcmp.gt.f32.partialorder %v1187, 0.0
        %vm1288 = vcmp.gt.f32.partialorder %v1192, 0.0
        %vm1289 = vcmp.gt.f32.partialorder %v1195, 0.0
        %vm1290 = vcmp.gt.f32.partialorder %v1200, 0.0
        %vm1291 = vcmp.gt.f32.partialorder %v1203, 0.0
        %vm1292 = vcmp.gt.f32.partialorder %v1208, 0.0
        %vm1293 = vcmp.gt.f32.partialorder %v1211, 0.0
        %vm1294 = vcmp.gt.f32.partialorder %v1216, 0.0
        %vm1295 = vcmp.gt.f32.partialorder %v1219, 0.0
        %vm1296 = vcmp.gt.f32.partialorder %v1224, 0.0
        %vm1297 = vcmp.gt.f32.partialorder %v1227, 0.0
        %vm1298 = vcmp.gt.f32.partialorder %v1232, 0.0
        %vm1299 = vcmp.gt.f32.partialorder %v1235, 0.0
        %vm1300 = vcmp.gt.f32.partialorder %v1240, 0.0
        %vm1301 = vcmp.gt.f32.partialorder %v1243, 0.0
        %vm1302 = vcmp.gt.f32.partialorder %v1248, 0.0
        %vm1303 = vcmp.gt.f32.partialorder %v1251, 0.0
        %vm1304 = vcmp.gt.f32.partialorder %v1256, 0.0
        %vm1305 = vcmp.gt.f32.partialorder %v1259, 0.0
        %vm1306 = vcmp.gt.f32.partialorder %v1264, 0.0
        %vm1307 = vcmp.gt.f32.partialorder %v1267, 0.0
        %vm1308 = vcmp.gt.f32.partialorder %v1272, 0.0
        %vm1309 = vcmp.gt.f32.partialorder %v1275, 0.0
        %v1310 = vmul.f32 %v1152, 0.01
        %v1311 = vmul.f32 %v1155, 0.01
        %v1312 = vmul.f32 %v1160, 0.01
        %v1313 = vmul.f32 %v1163, 0.01
        %v1314 = vmul.f32 %v1168, 0.01
        %v1315 = vmul.f32 %v1171, 0.01
        %v1316 = vmul.f32 %v1176, 0.01
        %v1317 = vmul.f32 %v1179, 0.01
        %v1318 = vmul.f32 %v1184, 0.01
        %v1319 = vmul.f32 %v1187, 0.01
        %v1320 = vmul.f32 %v1192, 0.01
        %v1321 = vmul.f32 %v1195, 0.01
        %v1322 = vmul.f32 %v1200, 0.01
        %v1323 = vmul.f32 %v1203, 0.01
        %v1324 = vmul.f32 %v1208, 0.01
        %v1325 = vmul.f32 %v1211, 0.01
        %v1326 = vmul.f32 %v1216, 0.01
        %v1327 = vmul.f32 %v1219, 0.01
        %v1328 = vmul.f32 %v1224, 0.01
        %v1329 = vmul.f32 %v1227, 0.01
        %v1330 = vmul.f32 %v1232, 0.01
        %v1331 = vmul.f32 %v1235, 0.01
        %v1332 = vmul.f32 %v1240, 0.01
        %v1333 = vmul.f32 %v1243, 0.01
        %v1334 = vmul.f32 %v1248, 0.01
        %v1335 = vmul.f32 %v1251, 0.01
        %v1336 = vmul.f32 %v1256, 0.01
        %v1337 = vmul.f32 %v1259, 0.01
        %v1338 = vmul.f32 %v1264, 0.01
        %v1339 = vmul.f32 %v1267, 0.01
        %v1340 = vmul.f32 %v1272, 0.01
        %v1341 = vmul.f32 %v1275, 0.01
        %v1342 = vsel %vm1278, %v1152, %v1310
        %v1343 = vsel %vm1279, %v1155, %v1311
        %v1344 = vsel %vm1280, %v1160, %v1312
        %v1345 = vsel %vm1281, %v1163, %v1313
        %v1346 = vsel %vm1282, %v1168, %v1314
        %v1347 = vsel %vm1283, %v1171, %v1315
        %v1348 = vsel %vm1284, %v1176, %v1316
        %v1349 = vsel %vm1285, %v1179, %v1317
        %v1350 = vsel %vm1286, %v1184, %v1318
        %v1351 = vsel %vm1287, %v1187, %v1319
        %v1352 = vsel %vm1288, %v1192, %v1320
        %v1353 = vsel %vm1289, %v1195, %v1321
        %v1354 = vsel %vm1290, %v1200, %v1322
        %v1355 = vsel %vm1291, %v1203, %v1323
        %v1356 = vsel %vm1292, %v1208, %v1324
        %v1357 = vsel %vm1293, %v1211, %v1325
        %v1358 = vsel %vm1294, %v1216, %v1326
        %v1359 = vsel %vm1295, %v1219, %v1327
        %v1360 = vsel %vm1296, %v1224, %v1328
        %v1361 = vsel %vm1297, %v1227, %v1329
        %v1362 = vsel %vm1298, %v1232, %v1330
        %v1363 = vsel %vm1299, %v1235, %v1331
        %v1364 = vsel %vm1300, %v1240, %v1332
        %v1365 = vsel %vm1301, %v1243, %v1333
        %v1366 = vsel %vm1302, %v1248, %v1334
        %v1367 = vsel %vm1303, %v1251, %v1335
        %v1368 = vsel %vm1304, %v1256, %v1336
        %v1369 = vsel %vm1305, %v1259, %v1337
        %v1370 = vsel %vm1306, %v1264, %v1338
        %v1371 = vsel %vm1307, %v1267, %v1339
        %v1372 = vsel %vm1308, %v1272, %v1340
        %v1373 = vsel %vm1309, %v1275, %v1341
        %v1374 = vpack.c.bf16 %v1343, %v1342
        %v1375 = vpack.c.bf16 %v1345, %v1344
        %v1376 = vpack.c.bf16 %v1347, %v1346
        %v1377 = vpack.c.bf16 %v1349, %v1348
        %v1378 = vpack.c.bf16 %v1351, %v1350
        %v1379 = vpack.c.bf16 %v1353, %v1352
        %v1380 = vpack.c.bf16 %v1355, %v1354
        %v1381 = vpack.c.bf16 %v1357, %v1356
        %v1382 = vpack.c.bf16 %v1359, %v1358
        %v1383 = vpack.c.bf16 %v1361, %v1360
        %v1384 = vpack.c.bf16 %v1363, %v1362
        %v1385 = vpack.c.bf16 %v1365, %v1364
        %v1386 = vpack.c.bf16 %v1367, %v1366
        %v1387 = vpack.c.bf16 %v1369, %v1368
        %v1388 = vpack.c.bf16 %v1371, %v1370
        %v1389 = vpack.c.bf16 %v1373, %v1372
        %v1390 = vld [vmem:[%s4] sm:$0xf]
        %v1391 = vld [vmem:[%s4 + $0x4] sm:$0xf]
        %v1392 = vld [vmem:[%s4 + $0x8] sm:$0xf]
        %v1393 = vld [vmem:[%s4 + $0xc] sm:$0xf]
        %v1394 = vld [vmem:[%s4 + $0x10] sm:$0xf]
        %v1395 = vld [vmem:[%s4 + $0x14] sm:$0xf]
        %v1396 = vld [vmem:[%s4 + $0x18] sm:$0xf]
        %v1397 = vld [vmem:[%s4 + $0x1c] sm:$0xf]
        %v1398 = vld [vmem:[%s4 + $0x20] sm:$0xf]
        %v1399 = vld [vmem:[%s4 + $0x24] sm:$0xf]
        %v1400 = vld [vmem:[%s4 + $0x28] sm:$0xf]
        %v1401 = vld [vmem:[%s4 + $0x2c] sm:$0xf]
        %v1402 = vld [vmem:[%s4 + $0x30] sm:$0xf]
        %v1403 = vld [vmem:[%s4 + $0x34] sm:$0xf]
        %v1404 = vld [vmem:[%s4 + $0x38] sm:$0xf]
        %v1405 = vld [vmem:[%s4 + $0x3c] sm:$0xf]
        %v1406 = vlaneseq
        %v1407 = vshrl.u32 %v1406, 7
        %v1408 = vsub.s32 3, %v1407
        %v1409 = vrot.slane %v328, %v1408
        %v1426 = vunpack.c.l.b16 %v1390
        %v1427 = vunpack.c.l.b16 %v1391
        %v1428 = vunpack.c.l.b16 %v1392
        %v1429 = vunpack.c.l.b16 %v1393
        %v1430 = vunpack.c.l.b16 %v1394
        %v1431 = vunpack.c.l.b16 %v1395
        %v1432 = vunpack.c.l.b16 %v1396
        %v1433 = vunpack.c.l.b16 %v1397
        %v1434 = vunpack.c.l.b16 %v1398
        %v1435 = vunpack.c.l.b16 %v1399
        %v1436 = vunpack.c.l.b16 %v1400
        %v1437 = vunpack.c.l.b16 %v1401
        %v1438 = vunpack.c.l.b16 %v1402
        %v1439 = vunpack.c.l.b16 %v1403
        %v1440 = vunpack.c.l.b16 %v1404
        %v1441 = vunpack.c.l.b16 %v1405
        %v1442 = vpack.c.b16 %v1427, %v1426
        %v1443 = vpack.c.b16 %v1429, %v1428
        %v1444 = vpack.c.b16 %v1431, %v1430
        %v1445 = vpack.c.b16 %v1433, %v1432
        %v1446 = vpack.c.b16 %v1435, %v1434
        %v1447 = vpack.c.b16 %v1437, %v1436
        %v1448 = vpack.c.b16 %v1439, %v1438
        %v1449 = vpack.c.b16 %v1441, %v1440
        %1458 = vmatprep.subr.bf16.mxu0 0
        %1459 = vmatpush1.bf16.msra.mxu0 %v1442
        %1460 = vmatprep.subr.bf16.mxu0 0
        %1461 = vmatpush1.bf16.msra.mxu0 %v1443
        %1462 = vmatprep.subr.bf16.mxu0 0
        %1463 = vmatpush1.bf16.msra.mxu0 %v1444
        %1464 = vmatprep.subr.bf16.mxu0 0
        %1465 = vmatpush1.bf16.msra.mxu0 %v1445
        %1466 = vmatprep.subr.bf16.mxu0 0
        %1467 = vmatpush1.bf16.msra.mxu0 %v1446
        %1468 = vmatprep.subr.bf16.mxu0 0
        %1469 = vmatpush1.bf16.msra.mxu0 %v1447
        %1470 = vmatprep.subr.bf16.mxu0 0
        %1471 = vmatpush1.bf16.msra.mxu0 %v1448
        %1472 = vmatprep.subr.bf16.mxu0 0
        %1473 = vmatpush1.bf16.msra.mxu0 %v1449
        %1474 = vmatprep.subr.bf16.mxu0 0
        %1475 = vmatpush1.bf16.msra.mxu0 0
        %1476 = vmatprep.subr.bf16.mxu0 0
        %1477 = vmatpush1.bf16.msra.mxu0 0
        %1478 = vmatprep.subr.bf16.mxu0 0
        %1479 = vmatpush1.bf16.msra.mxu0 0
        %1480 = vmatprep.subr.bf16.mxu0 0
        %1481 = vmatpush1.bf16.msra.mxu0 0
        %1482 = vmatprep.subr.bf16.mxu0 0
        %1483 = vmatpush1.bf16.msra.mxu0 0
        %1484 = vmatprep.subr.bf16.mxu0 0
        %1485 = vmatpush1.bf16.msra.mxu0 0
        %1486 = vmatprep.subr.bf16.mxu0 0
        %1487 = vmatpush1.bf16.msra.mxu0 0
        %1488 = vmatprep.subr.bf16.mxu0 0
        %1489 = vmatpush1.bf16.msra.mxu0 0
        %1490 = vmatprep.mubr.bf16.mxu0 0
        %1491 = vmatmul.mubr.bf16.gmra.mrb[0].mxu0 %v1374
        %v1492 = vpop.f32.mrb[0].mxu0
        %v1493 = vadd.f32 %v1409, %v1492
        %v1494 = vpop.f32.mrb[0].mxu0
        %v1495 = vpop.f32.mrb[0].mxu0
        %v1496 = vadd.f32 %v1409, %v1495
        %v1497 = vpop.f32.mrb[0].mxu0
        %1498 = vmatprep.mubr.bf16.mxu0 0
        %1499 = vmatmul.mubr.bf16.gmra.mrb[0].mxu0 %v1375
        %v1500 = vpop.f32.mrb[0].mxu0
        %v1501 = vadd.f32 %v1409, %v1500
        %v1502 = vpop.f32.mrb[0].mxu0
        %v1503 = vpop.f32.mrb[0].mxu0
        %v1504 = vadd.f32 %v1409, %v1503
        %v1505 = vpop.f32.mrb[0].mxu0
        %1506 = vmatprep.mubr.bf16.mxu0 0
        %1507 = vmatmul.mubr.bf16.gmra.mrb[0].mxu0 %v1376
        %v1508 = vpop.f32.mrb[0].mxu0
        %v1509 = vadd.f32 %v1409, %v1508
        %v1510 = vpop.f32.mrb[0].mxu0
        %v1511 = vpop.f32.mrb[0].mxu0
        %v1512 = vadd.f32 %v1409, %v1511
        %v1513 = vpop.f32.mrb[0].mxu0
        %1514 = vmatprep.mubr.bf16.mxu0 0
        %1515 = vmatmul.mubr.bf16.gmra.mrb[0].mxu0 %v1377
        %v1516 = vpop.f32.mrb[0].mxu0
        %v1517 = vadd.f32 %v1409, %v1516
        %v1518 = vpop.f32.mrb[0].mxu0
        %v1519 = vpop.f32.mrb[0].mxu0
        %v1520 = vadd.f32 %v1409, %v1519
        %v1521 = vpop.f32.mrb[0].mxu0
        %1522 = vmatprep.mubr.bf16.mxu0 0
        %1523 = vmatmul.mubr.bf16.gmra.mrb[0].mxu0 %v1378
        %v1524 = vpop.f32.mrb[0].mxu0
        %v1525 = vadd.f32 %v1409, %v1524
        %v1526 = vpop.f32.mrb[0].mxu0
        %v1527 = vpop.f32.mrb[0].mxu0
        %v1528 = vadd.f32 %v1409, %v1527
        %v1529 = vpop.f32.mrb[0].mxu0
        %1530 = vmatprep.mubr.bf16.mxu0 0
        %1531 = vmatmul.mubr.bf16.gmra.mrb[0].mxu0 %v1379
        %v1532 = vpop.f32.mrb[0].mxu0
        %v1533 = vadd.f32 %v1409, %v1532
        %v1534 = vpop.f32.mrb[0].mxu0
        %v1535 = vpop.f32.mrb[0].mxu0
        %v1536 = vadd.f32 %v1409, %v1535
        %v1537 = vpop.f32.mrb[0].mxu0
        %1538 = vmatprep.mubr.bf16.mxu0 0
        %1539 = vmatmul.mubr.bf16.gmra.mrb[0].mxu0 %v1380
        %v1540 = vpop.f32.mrb[0].mxu0
        %v1541 = vadd.f32 %v1409, %v1540
        %v1542 = vpop.f32.mrb[0].mxu0
        %v1543 = vpop.f32.mrb[0].mxu0
        %v1544 = vadd.f32 %v1409, %v1543
        %v1545 = vpop.f32.mrb[0].mxu0
        %1546 = vmatprep.mubr.bf16.mxu0 0
        %1547 = vmatmul.mubr.bf16.gmra.mrb[0].mxu0 %v1381
        %v1548 = vpop.f32.mrb[0].mxu0
        %v1549 = vadd.f32 %v1409, %v1548
        %v1550 = vpop.f32.mrb[0].mxu0
        %v1551 = vpop.f32.mrb[0].mxu0
        %v1552 = vadd.f32 %v1409, %v1551
        %v1553 = vpop.f32.mrb[0].mxu0
        %1554 = vmatprep.mubr.bf16.mxu0 0
        %1555 = vmatmul.mubr.bf16.gmra.mrb[0].mxu0 %v1382
        %v1556 = vpop.f32.mrb[0].mxu0
        %v1557 = vadd.f32 %v1409, %v1556
        %v1558 = vpop.f32.mrb[0].mxu0
        %v1559 = vpop.f32.mrb[0].mxu0
        %v1560 = vadd.f32 %v1409, %v1559
        %v1561 = vpop.f32.mrb[0].mxu0
        %1562 = vmatprep.mubr.bf16.mxu0 0
        %1563 = vmatmul.mubr.bf16.gmra.mrb[0].mxu0 %v1383
        %v1564 = vpop.f32.mrb[0].mxu0
        %v1565 = vadd.f32 %v1409, %v1564
        %v1566 = vpop.f32.mrb[0].mxu0
        %v1567 = vpop.f32.mrb[0].mxu0
        %v1568 = vadd.f32 %v1409, %v1567
        %v1569 = vpop.f32.mrb[0].mxu0
        %1570 = vmatprep.mubr.bf16.mxu0 0
        %1571 = vmatmul.mubr.bf16.gmra.mrb[0].mxu0 %v1384
        %v1572 = vpop.f32.mrb[0].mxu0
        %v1573 = vadd.f32 %v1409, %v1572
        %v1574 = vpop.f32.mrb[0].mxu0
        %v1575 = vpop.f32.mrb[0].mxu0
        %v1576 = vadd.f32 %v1409, %v1575
        %v1577 = vpop.f32.mrb[0].mxu0
        %1578 = vmatprep.mubr.bf16.mxu0 0
        %1579 = vmatmul.mubr.bf16.gmra.mrb[0].mxu0 %v1385
        %v1580 = vpop.f32.mrb[0].mxu0
        %v1581 = vadd.f32 %v1409, %v1580
        %v1582 = vpop.f32.mrb[0].mxu0
        %v1583 = vpop.f32.mrb[0].mxu0
        %v1584 = vadd.f32 %v1409, %v1583
        %v1585 = vpop.f32.mrb[0].mxu0
        %1586 = vmatprep.mubr.bf16.mxu0 0
        %1587 = vmatmul.mubr.bf16.gmra.mrb[0].mxu0 %v1386
        %v1588 = vpop.f32.mrb[0].mxu0
        %v1589 = vadd.f32 %v1409, %v1588
        %v1590 = vpop.f32.mrb[0].mxu0
        %v1591 = vpop.f32.mrb[0].mxu0
        %v1592 = vadd.f32 %v1409, %v1591
        %v1593 = vpop.f32.mrb[0].mxu0
        %1594 = vmatprep.mubr.bf16.mxu0 0
        %1595 = vmatmul.mubr.bf16.gmra.mrb[0].mxu0 %v1387
        %v1596 = vpop.f32.mrb[0].mxu0
        %v1597 = vadd.f32 %v1409, %v1596
        %v1598 = vpop.f32.mrb[0].mxu0
        %v1599 = vpop.f32.mrb[0].mxu0
        %v1600 = vadd.f32 %v1409, %v1599
        %v1601 = vpop.f32.mrb[0].mxu0
        %1602 = vmatprep.mubr.bf16.mxu0 0
        %1603 = vmatmul.mubr.bf16.gmra.mrb[0].mxu0 %v1388
        %v1604 = vpop.f32.mrb[0].mxu0
        %v1605 = vadd.f32 %v1409, %v1604
        %v1606 = vpop.f32.mrb[0].mxu0
        %v1607 = vpop.f32.mrb[0].mxu0
        %v1608 = vadd.f32 %v1409, %v1607
        %v1609 = vpop.f32.mrb[0].mxu0
        %1610 = vmatprep.mubr.bf16.mxu0 0
        %1611 = vmatmul.mubr.bf16.gmra.mrb[0].mxu0 %v1389
        %v1612 = vpop.f32.mrb[0].mxu0
        %v1613 = vadd.f32 %v1409, %v1612
        %v1614 = vpop.f32.mrb[0].mxu0
        %v1615 = vpop.f32.mrb[0].mxu0
        %v1616 = vadd.f32 %v1409, %v1615
        %v1617 = vpop.f32.mrb[0].mxu0
        %1618 = vdwg.mxu0
        %vm1619 = vcmp.gt.f32.partialorder %v1493, 0.0
        %vm1620 = vcmp.gt.f32.partialorder %v1496, 0.0
        %vm1621 = vcmp.gt.f32.partialorder %v1501, 0.0
        %vm1622 = vcmp.gt.f32.partialorder %v1504, 0.0
        %vm1623 = vcmp.gt.f32.partialorder %v1509, 0.0
        %vm1624 = vcmp.gt.f32.partialorder %v1512, 0.0
        %vm1625 = vcmp.gt.f32.partialorder %v1517, 0.0
        %vm1626 = vcmp.gt.f32.partialorder %v1520, 0.0
        %vm1627 = vcmp.gt.f32.partialorder %v1525, 0.0
        %vm1628 = vcmp.gt.f32.partialorder %v1528, 0.0
        %vm1629 = vcmp.gt.f32.partialorder %v1533, 0.0
        %vm1630 = vcmp.gt.f32.partialorder %v1536, 0.0
        %vm1631 = vcmp.gt.f32.partialorder %v1541, 0.0
        %vm1632 = vcmp.gt.f32.partialorder %v1544, 0.0
        %vm1633 = vcmp.gt.f32.partialorder %v1549, 0.0
        %vm1634 = vcmp.gt.f32.partialorder %v1552, 0.0
        %vm1635 = vcmp.gt.f32.partialorder %v1557, 0.0
        %vm1636 = vcmp.gt.f32.partialorder %v1560, 0.0
        %vm1637 = vcmp.gt.f32.partialorder %v1565, 0.0
        %vm1638 = vcmp.gt.f32.partialorder %v1568, 0.0
        %vm1639 = vcmp.gt.f32.partialorder %v1573, 0.0
        %vm1640 = vcmp.gt.f32.partialorder %v1576, 0.0
        %vm1641 = vcmp.gt.f32.partialorder %v1581, 0.0
        %vm1642 = vcmp.gt.f32.partialorder %v1584, 0.0
        %vm1643 = vcmp.gt.f32.partialorder %v1589, 0.0
        %vm1644 = vcmp.gt.f32.partialorder %v1592, 0.0
        %vm1645 = vcmp.gt.f32.partialorder %v1597, 0.0
        %vm1646 = vcmp.gt.f32.partialorder %v1600, 0.0
        %vm1647 = vcmp.gt.f32.partialorder %v1605, 0.0
        %vm1648 = vcmp.gt.f32.partialorder %v1608, 0.0
        %vm1649 = vcmp.gt.f32.partialorder %v1613, 0.0
        %vm1650 = vcmp.gt.f32.partialorder %v1616, 0.0
        %v1651 = vmul.f32 %v1493, 0.01
        %v1652 = vmul.f32 %v1496, 0.01
        %v1653 = vmul.f32 %v1501, 0.01
        %v1654 = vmul.f32 %v1504, 0.01
        %v1655 = vmul.f32 %v1509, 0.01
        %v1656 = vmul.f32 %v1512, 0.01
        %v1657 = vmul.f32 %v1517, 0.01
        %v1658 = vmul.f32 %v1520, 0.01
        %v1659 = vmul.f32 %v1525, 0.01
        %v1660 = vmul.f32 %v1528, 0.01
        %v1661 = vmul.f32 %v1533, 0.01
        %v1662 = vmul.f32 %v1536, 0.01
        %v1663 = vmul.f32 %v1541, 0.01
        %v1664 = vmul.f32 %v1544, 0.01
        %v1665 = vmul.f32 %v1549, 0.01
        %v1666 = vmul.f32 %v1552, 0.01
        %v1667 = vmul.f32 %v1557, 0.01
        %v1668 = vmul.f32 %v1560, 0.01
        %v1669 = vmul.f32 %v1565, 0.01
        %v1670 = vmul.f32 %v1568, 0.01
        %v1671 = vmul.f32 %v1573, 0.01
        %v1672 = vmul.f32 %v1576, 0.01
        %v1673 = vmul.f32 %v1581, 0.01
        %v1674 = vmul.f32 %v1584, 0.01
        %v1675 = vmul.f32 %v1589, 0.01
        %v1676 = vmul.f32 %v1592, 0.01
        %v1677 = vmul.f32 %v1597, 0.01
        %v1678 = vmul.f32 %v1600, 0.01
        %v1679 = vmul.f32 %v1605, 0.01
        %v1680 = vmul.f32 %v1608, 0.01
        %v1681 = vmul.f32 %v1613, 0.01
        %v1682 = vmul.f32 %v1616, 0.01
        %v1683 = vsel %vm1619, %v1493, %v1651
        %v1684 = vsel %vm1620, %v1496, %v1652
        %v1685 = vsel %vm1621, %v1501, %v1653
        %v1686 = vsel %vm1622, %v1504, %v1654
        %v1687 = vsel %vm1623, %v1509, %v1655
        %v1688 = vsel %vm1624, %v1512, %v1656
        %v1689 = vsel %vm1625, %v1517, %v1657
        %v1690 = vsel %vm1626, %v1520, %v1658
        %v1691 = vsel %vm1627, %v1525, %v1659
        %v1692 = vsel %vm1628, %v1528, %v1660
        %v1693 = vsel %vm1629, %v1533, %v1661
        %v1694 = vsel %vm1630, %v1536, %v1662
        %v1695 = vsel %vm1631, %v1541, %v1663
        %v1696 = vsel %vm1632, %v1544, %v1664
        %v1697 = vsel %vm1633, %v1549, %v1665
        %v1698 = vsel %vm1634, %v1552, %v1666
        %v1699 = vsel %vm1635, %v1557, %v1667
        %v1700 = vsel %vm1636, %v1560, %v1668
        %v1701 = vsel %vm1637, %v1565, %v1669
        %v1702 = vsel %vm1638, %v1568, %v1670
        %v1703 = vsel %vm1639, %v1573, %v1671
        %v1704 = vsel %vm1640, %v1576, %v1672
        %v1705 = vsel %vm1641, %v1581, %v1673
        %v1706 = vsel %vm1642, %v1584, %v1674
        %v1707 = vsel %vm1643, %v1589, %v1675
        %v1708 = vsel %vm1644, %v1592, %v1676
        %v1709 = vsel %vm1645, %v1597, %v1677
        %v1710 = vsel %vm1646, %v1600, %v1678
        %v1711 = vsel %vm1647, %v1605, %v1679
        %v1712 = vsel %vm1648, %v1608, %v1680
        %v1713 = vsel %vm1649, %v1613, %v1681
        %v1714 = vsel %vm1650, %v1616, %v1682
        %v1715 = vpack.c.bf16 %v1684, %v1683
        %v1716 = vpack.c.bf16 %v1686, %v1685
        %v1717 = vpack.c.bf16 %v1688, %v1687
        %v1718 = vpack.c.bf16 %v1690, %v1689
        %v1719 = vpack.c.bf16 %v1692, %v1691
        %v1720 = vpack.c.bf16 %v1694, %v1693
        %v1721 = vpack.c.bf16 %v1696, %v1695
        %v1722 = vpack.c.bf16 %v1698, %v1697
        %v1723 = vpack.c.bf16 %v1700, %v1699
        %v1724 = vpack.c.bf16 %v1702, %v1701
        %v1725 = vpack.c.bf16 %v1704, %v1703
        %v1726 = vpack.c.bf16 %v1706, %v1705
        %v1727 = vpack.c.bf16 %v1708, %v1707
        %v1728 = vpack.c.bf16 %v1710, %v1709
        %v1729 = vpack.c.bf16 %v1712, %v1711
        %v1730 = vpack.c.bf16 %v1714, %v1713
        %v1731 = vld [vmem:[%s5] sm:$0xf]
        %v1732 = vld [vmem:[%s5 + $0x4] sm:$0xf]
        %v1733 = vld [vmem:[%s5 + $0x8] sm:$0xf]
        %v1734 = vld [vmem:[%s5 + $0xc] sm:$0xf]
        %v1735 = vld [vmem:[%s5 + $0x10] sm:$0xf]
        %v1736 = vld [vmem:[%s5 + $0x14] sm:$0xf]
        %v1737 = vld [vmem:[%s5 + $0x18] sm:$0xf]
        %v1738 = vld [vmem:[%s5 + $0x1c] sm:$0xf]
        %v1739 = vlaneseq
        %v1740 = vshrl.u32 %v1739, 7
        %v1741 = vsub.s32 4, %v1740
        %v1742 = vrot.slane %v328, %v1741
        %v1751 = vunpack.c.l.b16 %v1731
        %v1752 = vunpack.c.l.b16 %v1732
        %v1753 = vunpack.c.l.b16 %v1733
        %v1754 = vunpack.c.l.b16 %v1734
        %v1755 = vunpack.c.l.b16 %v1735
        %v1756 = vunpack.c.l.b16 %v1736
        %v1757 = vunpack.c.l.b16 %v1737
        %v1758 = vunpack.c.l.b16 %v1738
        %v1759 = vpack.c.b16 %v1752, %v1751
        %v1760 = vpack.c.b16 %v1754, %v1753
        %v1761 = vpack.c.b16 %v1756, %v1755
        %v1762 = vpack.c.b16 %v1758, %v1757
        %vm1767 = vcmask 523264
        %v1769 = vsel %vm1767, %v1715, 0
        %v1772 = vsel %vm1767, %v1716, 0
        %v1775 = vsel %vm1767, %v1717, 0
        %v1778 = vsel %vm1767, %v1718, 0
        %v1781 = vsel %vm1767, %v1719, 0
        %v1784 = vsel %vm1767, %v1720, 0
        %v1787 = vsel %vm1767, %v1721, 0
        %v1790 = vsel %vm1767, %v1722, 0
        %v1793 = vsel %vm1767, %v1723, 0
        %v1796 = vsel %vm1767, %v1724, 0
        %v1799 = vsel %vm1767, %v1725, 0
        %v1802 = vsel %vm1767, %v1726, 0
        %v1805 = vsel %vm1767, %v1727, 0
        %v1808 = vsel %vm1767, %v1728, 0
        %v1811 = vsel %vm1767, %v1729, 0
        %v1814 = vsel %vm1767, %v1730, 0
        %1816 = vmatprep.subr.bf16.mxu0 0
        %1817 = vmatpush1.bf16.msra.mxu0 %v1759
        %1818 = vmatprep.subr.bf16.mxu0 0
        %1819 = vmatpush1.bf16.msra.mxu0 %v1760
        %1820 = vmatprep.subr.bf16.mxu0 0
        %1821 = vmatpush1.bf16.msra.mxu0 %v1761
        %1822 = vmatprep.subr.bf16.mxu0 0
        %1823 = vmatpush1.bf16.msra.mxu0 %v1762
        %1824 = vmatprep.subr.bf16.mxu0 0
        %1825 = vmatpush1.bf16.msra.mxu0 0
        %1826 = vmatprep.subr.bf16.mxu0 0
        %1827 = vmatpush1.bf16.msra.mxu0 0
        %1828 = vmatprep.subr.bf16.mxu0 0
        %1829 = vmatpush1.bf16.msra.mxu0 0
        %1830 = vmatprep.subr.bf16.mxu0 0
        %1831 = vmatpush1.bf16.msra.mxu0 0
        %1832 = vmatprep.subr.bf16.mxu0 0
        %1833 = vmatpush1.bf16.msra.mxu0 0
        %1834 = vmatprep.subr.bf16.mxu0 0
        %1835 = vmatpush1.bf16.msra.mxu0 0
        %1836 = vmatprep.subr.bf16.mxu0 0
        %1837 = vmatpush1.bf16.msra.mxu0 0
        %1838 = vmatprep.subr.bf16.mxu0 0
        %1839 = vmatpush1.bf16.msra.mxu0 0
        %1840 = vmatprep.subr.bf16.mxu0 0
        %1841 = vmatpush1.bf16.msra.mxu0 0
        %1842 = vmatprep.subr.bf16.mxu0 0
        %1843 = vmatpush1.bf16.msra.mxu0 0
        %1844 = vmatprep.subr.bf16.mxu0 0
        %1845 = vmatpush1.bf16.msra.mxu0 0
        %1846 = vmatprep.subr.bf16.mxu0 0
        %1847 = vmatpush1.bf16.msra.mxu0 0
        %1848 = vmatprep.mubr.bf16.mxu0 0
        %1849 = vmatmul.mubr.bf16.gmra.mrb[0].mxu0 %v1769
        %v1850 = vpop.f32.mrb[0].mxu0
        %v1851 = vadd.f32 %v1742, %v1850
        %v1852 = vpop.f32.mrb[0].mxu0
        %v1853 = vpop.f32.mrb[0].mxu0
        %v1854 = vadd.f32 %v1742, %v1853
        %v1855 = vpop.f32.mrb[0].mxu0
        %1856 = vmatprep.mubr.bf16.mxu0 0
        %1857 = vmatmul.mubr.bf16.gmra.mrb[0].mxu0 %v1772
        %v1858 = vpop.f32.mrb[0].mxu0
        %v1859 = vadd.f32 %v1742, %v1858
        %v1860 = vpop.f32.mrb[0].mxu0
        %v1861 = vpop.f32.mrb[0].mxu0
        %v1862 = vadd.f32 %v1742, %v1861
        %v1863 = vpop.f32.mrb[0].mxu0
        %1864 = vmatprep.mubr.bf16.mxu0 0
        %1865 = vmatmul.mubr.bf16.gmra.mrb[0].mxu0 %v1775
        %v1866 = vpop.f32.mrb[0].mxu0
        %v1867 = vadd.f32 %v1742, %v1866
        %v1868 = vpop.f32.mrb[0].mxu0
        %v1869 = vpop.f32.mrb[0].mxu0
        %v1870 = vadd.f32 %v1742, %v1869
        %v1871 = vpop.f32.mrb[0].mxu0
        %1872 = vmatprep.mubr.bf16.mxu0 0
        %1873 = vmatmul.mubr.bf16.gmra.mrb[0].mxu0 %v1778
        %v1874 = vpop.f32.mrb[0].mxu0
        %v1875 = vadd.f32 %v1742, %v1874
        %v1876 = vpop.f32.mrb[0].mxu0
        %v1877 = vpop.f32.mrb[0].mxu0
        %v1878 = vadd.f32 %v1742, %v1877
        %v1879 = vpop.f32.mrb[0].mxu0
        %1880 = vmatprep.mubr.bf16.mxu0 0
        %1881 = vmatmul.mubr.bf16.gmra.mrb[0].mxu0 %v1781
        %v1882 = vpop.f32.mrb[0].mxu0
        %v1883 = vadd.f32 %v1742, %v1882
        %v1884 = vpop.f32.mrb[0].mxu0
        %v1885 = vpop.f32.mrb[0].mxu0
        %v1886 = vadd.f32 %v1742, %v1885
        %v1887 = vpop.f32.mrb[0].mxu0
        %1888 = vmatprep.mubr.bf16.mxu0 0
        %1889 = vmatmul.mubr.bf16.gmra.mrb[0].mxu0 %v1784
        %v1890 = vpop.f32.mrb[0].mxu0
        %v1891 = vadd.f32 %v1742, %v1890
        %v1892 = vpop.f32.mrb[0].mxu0
        %v1893 = vpop.f32.mrb[0].mxu0
        %v1894 = vadd.f32 %v1742, %v1893
        %v1895 = vpop.f32.mrb[0].mxu0
        %1896 = vmatprep.mubr.bf16.mxu0 0
        %1897 = vmatmul.mubr.bf16.gmra.mrb[0].mxu0 %v1787
        %v1898 = vpop.f32.mrb[0].mxu0
        %v1899 = vadd.f32 %v1742, %v1898
        %v1900 = vpop.f32.mrb[0].mxu0
        %v1901 = vpop.f32.mrb[0].mxu0
        %v1902 = vadd.f32 %v1742, %v1901
        %v1903 = vpop.f32.mrb[0].mxu0
        %1904 = vmatprep.mubr.bf16.mxu0 0
        %1905 = vmatmul.mubr.bf16.gmra.mrb[0].mxu0 %v1790
        %v1906 = vpop.f32.mrb[0].mxu0
        %v1907 = vadd.f32 %v1742, %v1906
        %v1908 = vpop.f32.mrb[0].mxu0
        %v1909 = vpop.f32.mrb[0].mxu0
        %v1910 = vadd.f32 %v1742, %v1909
        %v1911 = vpop.f32.mrb[0].mxu0
        %1912 = vmatprep.mubr.bf16.mxu0 0
        %1913 = vmatmul.mubr.bf16.gmra.mrb[0].mxu0 %v1793
        %v1914 = vpop.f32.mrb[0].mxu0
        %v1915 = vadd.f32 %v1742, %v1914
        %v1916 = vpop.f32.mrb[0].mxu0
        %v1917 = vpop.f32.mrb[0].mxu0
        %v1918 = vadd.f32 %v1742, %v1917
        %v1919 = vpop.f32.mrb[0].mxu0
        %1920 = vmatprep.mubr.bf16.mxu0 0
        %1921 = vmatmul.mubr.bf16.gmra.mrb[0].mxu0 %v1796
        %v1922 = vpop.f32.mrb[0].mxu0
        %v1923 = vadd.f32 %v1742, %v1922
        %v1924 = vpop.f32.mrb[0].mxu0
        %v1925 = vpop.f32.mrb[0].mxu0
        %v1926 = vadd.f32 %v1742, %v1925
        %v1927 = vpop.f32.mrb[0].mxu0
        %1928 = vmatprep.mubr.bf16.mxu0 0
        %1929 = vmatmul.mubr.bf16.gmra.mrb[0].mxu0 %v1799
        %v1930 = vpop.f32.mrb[0].mxu0
        %v1931 = vadd.f32 %v1742, %v1930
        %v1932 = vpop.f32.mrb[0].mxu0
        %v1933 = vpop.f32.mrb[0].mxu0
        %v1934 = vadd.f32 %v1742, %v1933
        %v1935 = vpop.f32.mrb[0].mxu0
        %1936 = vmatprep.mubr.bf16.mxu0 0
        %1937 = vmatmul.mubr.bf16.gmra.mrb[0].mxu0 %v1802
        %v1938 = vpop.f32.mrb[0].mxu0
        %v1939 = vadd.f32 %v1742, %v1938
        %v1940 = vpop.f32.mrb[0].mxu0
        %v1941 = vpop.f32.mrb[0].mxu0
        %v1942 = vadd.f32 %v1742, %v1941
        %v1943 = vpop.f32.mrb[0].mxu0
        %1944 = vmatprep.mubr.bf16.mxu0 0
        %1945 = vmatmul.mubr.bf16.gmra.mrb[0].mxu0 %v1805
        %v1946 = vpop.f32.mrb[0].mxu0
        %v1947 = vadd.f32 %v1742, %v1946
        %v1948 = vpop.f32.mrb[0].mxu0
        %v1949 = vpop.f32.mrb[0].mxu0
        %v1950 = vadd.f32 %v1742, %v1949
        %v1951 = vpop.f32.mrb[0].mxu0
        %1952 = vmatprep.mubr.bf16.mxu0 0
        %1953 = vmatmul.mubr.bf16.gmra.mrb[0].mxu0 %v1808
        %v1954 = vpop.f32.mrb[0].mxu0
        %v1955 = vadd.f32 %v1742, %v1954
        %v1956 = vpop.f32.mrb[0].mxu0
        %v1957 = vpop.f32.mrb[0].mxu0
        %v1958 = vadd.f32 %v1742, %v1957
        %v1959 = vpop.f32.mrb[0].mxu0
        %1960 = vmatprep.mubr.bf16.mxu0 0
        %1961 = vmatmul.mubr.bf16.gmra.mrb[0].mxu0 %v1811
        %v1962 = vpop.f32.mrb[0].mxu0
        %v1963 = vadd.f32 %v1742, %v1962
        %v1964 = vpop.f32.mrb[0].mxu0
        %v1965 = vpop.f32.mrb[0].mxu0
        %v1966 = vadd.f32 %v1742, %v1965
        %v1967 = vpop.f32.mrb[0].mxu0
        %1968 = vmatprep.mubr.bf16.mxu0 0
        %1969 = vmatmul.mubr.bf16.gmra.mrb[0].mxu0 %v1814
        %v1970 = vpop.f32.mrb[0].mxu0
        %v1971 = vadd.f32 %v1742, %v1970
        %v1972 = vpop.f32.mrb[0].mxu0
        %v1973 = vpop.f32.mrb[0].mxu0
        %v1974 = vadd.f32 %v1742, %v1973
        %v1975 = vpop.f32.mrb[0].mxu0
        %1976 = vdwg.mxu0
        %vm1977 = vcmp.gt.f32.partialorder %v1851, 0.0
        %vm1978 = vcmp.gt.f32.partialorder %v1854, 0.0
        %vm1979 = vcmp.gt.f32.partialorder %v1859, 0.0
        %vm1980 = vcmp.gt.f32.partialorder %v1862, 0.0
        %vm1981 = vcmp.gt.f32.partialorder %v1867, 0.0
        %vm1982 = vcmp.gt.f32.partialorder %v1870, 0.0
        %vm1983 = vcmp.gt.f32.partialorder %v1875, 0.0
        %vm1984 = vcmp.gt.f32.partialorder %v1878, 0.0
        %vm1985 = vcmp.gt.f32.partialorder %v1883, 0.0
        %vm1986 = vcmp.gt.f32.partialorder %v1886, 0.0
        %vm1987 = vcmp.gt.f32.partialorder %v1891, 0.0
        %vm1988 = vcmp.gt.f32.partialorder %v1894, 0.0
        %vm1989 = vcmp.gt.f32.partialorder %v1899, 0.0
        %vm1990 = vcmp.gt.f32.partialorder %v1902, 0.0
        %vm1991 = vcmp.gt.f32.partialorder %v1907, 0.0
        %vm1992 = vcmp.gt.f32.partialorder %v1910, 0.0
        %vm1993 = vcmp.gt.f32.partialorder %v1915, 0.0
        %vm1994 = vcmp.gt.f32.partialorder %v1918, 0.0
        %vm1995 = vcmp.gt.f32.partialorder %v1923, 0.0
        %vm1996 = vcmp.gt.f32.partialorder %v1926, 0.0
        %vm1997 = vcmp.gt.f32.partialorder %v1931, 0.0
        %vm1998 = vcmp.gt.f32.partialorder %v1934, 0.0
        %vm1999 = vcmp.gt.f32.partialorder %v1939, 0.0
        %vm2000 = vcmp.gt.f32.partialorder %v1942, 0.0
        %vm2001 = vcmp.gt.f32.partialorder %v1947, 0.0
        %vm2002 = vcmp.gt.f32.partialorder %v1950, 0.0
        %vm2003 = vcmp.gt.f32.partialorder %v1955, 0.0
        %vm2004 = vcmp.gt.f32.partialorder %v1958, 0.0
        %vm2005 = vcmp.gt.f32.partialorder %v1963, 0.0
        %vm2006 = vcmp.gt.f32.partialorder %v1966, 0.0
        %vm2007 = vcmp.gt.f32.partialorder %v1971, 0.0
        %vm2008 = vcmp.gt.f32.partialorder %v1974, 0.0
        %v2009 = vmul.f32 %v1851, 0.01
        %v2010 = vmul.f32 %v1854, 0.01
        %v2011 = vmul.f32 %v1859, 0.01
        %v2012 = vmul.f32 %v1862, 0.01
        %v2013 = vmul.f32 %v1867, 0.01
        %v2014 = vmul.f32 %v1870, 0.01
        %v2015 = vmul.f32 %v1875, 0.01
        %v2016 = vmul.f32 %v1878, 0.01
        %v2017 = vmul.f32 %v1883, 0.01
        %v2018 = vmul.f32 %v1886, 0.01
        %v2019 = vmul.f32 %v1891, 0.01
        %v2020 = vmul.f32 %v1894, 0.01
        %v2021 = vmul.f32 %v1899, 0.01
        %v2022 = vmul.f32 %v1902, 0.01
        %v2023 = vmul.f32 %v1907, 0.01
        %v2024 = vmul.f32 %v1910, 0.01
        %v2025 = vmul.f32 %v1915, 0.01
        %v2026 = vmul.f32 %v1918, 0.01
        %v2027 = vmul.f32 %v1923, 0.01
        %v2028 = vmul.f32 %v1926, 0.01
        %v2029 = vmul.f32 %v1931, 0.01
        %v2030 = vmul.f32 %v1934, 0.01
        %v2031 = vmul.f32 %v1939, 0.01
        %v2032 = vmul.f32 %v1942, 0.01
        %v2033 = vmul.f32 %v1947, 0.01
        %v2034 = vmul.f32 %v1950, 0.01
        %v2035 = vmul.f32 %v1955, 0.01
        %v2036 = vmul.f32 %v1958, 0.01
        %v2037 = vmul.f32 %v1963, 0.01
        %v2038 = vmul.f32 %v1966, 0.01
        %v2039 = vmul.f32 %v1971, 0.01
        %v2040 = vmul.f32 %v1974, 0.01
        %v2041 = vsel %vm1977, %v1851, %v2009
        %v2042 = vsel %vm1978, %v1854, %v2010
        %v2043 = vsel %vm1979, %v1859, %v2011
        %v2044 = vsel %vm1980, %v1862, %v2012
        %v2045 = vsel %vm1981, %v1867, %v2013
        %v2046 = vsel %vm1982, %v1870, %v2014
        %v2047 = vsel %vm1983, %v1875, %v2015
        %v2048 = vsel %vm1984, %v1878, %v2016
        %v2049 = vsel %vm1985, %v1883, %v2017
        %v2050 = vsel %vm1986, %v1886, %v2018
        %v2051 = vsel %vm1987, %v1891, %v2019
        %v2052 = vsel %vm1988, %v1894, %v2020
        %v2053 = vsel %vm1989, %v1899, %v2021
        %v2054 = vsel %vm1990, %v1902, %v2022
        %v2055 = vsel %vm1991, %v1907, %v2023
        %v2056 = vsel %vm1992, %v1910, %v2024
        %v2057 = vsel %vm1993, %v1915, %v2025
        %v2058 = vsel %vm1994, %v1918, %v2026
        %v2059 = vsel %vm1995, %v1923, %v2027
        %v2060 = vsel %vm1996, %v1926, %v2028
        %v2061 = vsel %vm1997, %v1931, %v2029
        %v2062 = vsel %vm1998, %v1934, %v2030
        %v2063 = vsel %vm1999, %v1939, %v2031
        %v2064 = vsel %vm2000, %v1942, %v2032
        %v2065 = vsel %vm2001, %v1947, %v2033
        %v2066 = vsel %vm2002, %v1950, %v2034
        %v2067 = vsel %vm2003, %v1955, %v2035
        %v2068 = vsel %vm2004, %v1958, %v2036
        %v2069 = vsel %vm2005, %v1963, %v2037
        %v2070 = vsel %vm2006, %v1966, %v2038
        %v2071 = vsel %vm2007, %v1971, %v2039
        %v2072 = vsel %vm2008, %v1974, %v2040
        %v2073 = vpack.c.bf16 %v2042, %v2041
        %v2074 = vpack.c.bf16 %v2044, %v2043
        %v2075 = vpack.c.bf16 %v2046, %v2045
        %v2076 = vpack.c.bf16 %v2048, %v2047
        %v2077 = vpack.c.bf16 %v2050, %v2049
        %v2078 = vpack.c.bf16 %v2052, %v2051
        %v2079 = vpack.c.bf16 %v2054, %v2053
        %v2080 = vpack.c.bf16 %v2056, %v2055
        %v2081 = vpack.c.bf16 %v2058, %v2057
        %v2082 = vpack.c.bf16 %v2060, %v2059
        %v2083 = vpack.c.bf16 %v2062, %v2061
        %v2084 = vpack.c.bf16 %v2064, %v2063
        %v2085 = vpack.c.bf16 %v2066, %v2065
        %v2086 = vpack.c.bf16 %v2068, %v2067
        %v2087 = vpack.c.bf16 %v2070, %v2069
        %v2088 = vpack.c.bf16 %v2072, %v2071
        %v2089 = vld [vmem:[%s6] sm:$0xf]
        %v2090 = vld [vmem:[%s6 + $0x4] sm:$0xf]
        %v2091 = vld [vmem:[%s6 + $0x8] sm:$0xf]
        %v2092 = vld [vmem:[%s6 + $0xc] sm:$0xf]
        %v2093 = vld [vmem:[%s6 + $0x10] sm:$0xf]
        %v2094 = vld [vmem:[%s6 + $0x14] sm:$0xf]
        %v2095 = vld [vmem:[%s6 + $0x18] sm:$0xf]
        %v2096 = vld [vmem:[%s6 + $0x1c] sm:$0xf]
        %v2097 = vlaneseq
        %v2098 = vshrl.u32 %v2097, 7
        %v2099 = vsub.s32 5, %v2098
        %v2100 = vrot.slane %v328, %v2099
        %v2109 = vunpack.c.l.b16 %v2089
        %v2110 = vunpack.c.l.b16 %v2090
        %v2111 = vunpack.c.l.b16 %v2091
        %v2112 = vunpack.c.l.b16 %v2092
        %v2113 = vunpack.c.l.b16 %v2093
        %v2114 = vunpack.c.l.b16 %v2094
        %v2115 = vunpack.c.l.b16 %v2095
        %v2116 = vunpack.c.l.b16 %v2096
        %v2117 = vpack.c.b16 %v2110, %v2109
        %v2118 = vpack.c.b16 %v2112, %v2111
        %v2119 = vpack.c.b16 %v2114, %v2113
        %v2120 = vpack.c.b16 %v2116, %v2115
        %v2126 = vsel %vm1767, %v2073, 0
        %v2129 = vsel %vm1767, %v2074, 0
        %v2132 = vsel %vm1767, %v2075, 0
        %v2135 = vsel %vm1767, %v2076, 0
        %v2138 = vsel %vm1767, %v2077, 0
        %v2141 = vsel %vm1767, %v2078, 0
        %v2144 = vsel %vm1767, %v2079, 0
        %v2147 = vsel %vm1767, %v2080, 0
        %v2150 = vsel %vm1767, %v2081, 0
        %v2153 = vsel %vm1767, %v2082, 0
        %v2156 = vsel %vm1767, %v2083, 0
        %v2159 = vsel %vm1767, %v2084, 0
        %v2162 = vsel %vm1767, %v2085, 0
        %v2165 = vsel %vm1767, %v2086, 0
        %v2168 = vsel %vm1767, %v2087, 0
        %v2171 = vsel %vm1767, %v2088, 0
        %2173 = vmatprep.subr.bf16.mxu0 0
        %2174 = vmatpush1.bf16.msra.mxu0 %v2117
        %2175 = vmatprep.subr.bf16.mxu0 0
        %2176 = vmatpush1.bf16.msra.mxu0 %v2118
        %2177 = vmatprep.subr.bf16.mxu0 0
        %2178 = vmatpush1.bf16.msra.mxu0 %v2119
        %2179 = vmatprep.subr.bf16.mxu0 0
        %2180 = vmatpush1.bf16.msra.mxu0 %v2120
        %2181 = vmatprep.subr.bf16.mxu0 0
        %2182 = vmatpush1.bf16.msra.mxu0 0
        %2183 = vmatprep.subr.bf16.mxu0 0
        %2184 = vmatpush1.bf16.msra.mxu0 0
        %2185 = vmatprep.subr.bf16.mxu0 0
        %2186 = vmatpush1.bf16.msra.mxu0 0
        %2187 = vmatprep.subr.bf16.mxu0 0
        %2188 = vmatpush1.bf16.msra.mxu0 0
        %2189 = vmatprep.subr.bf16.mxu0 0
        %2190 = vmatpush1.bf16.msra.mxu0 0
        %2191 = vmatprep.subr.bf16.mxu0 0
        %2192 = vmatpush1.bf16.msra.mxu0 0
        %2193 = vmatprep.subr.bf16.mxu0 0
        %2194 = vmatpush1.bf16.msra.mxu0 0
        %2195 = vmatprep.subr.bf16.mxu0 0
        %2196 = vmatpush1.bf16.msra.mxu0 0
        %2197 = vmatprep.subr.bf16.mxu0 0
        %2198 = vmatpush1.bf16.msra.mxu0 0
        %2199 = vmatprep.subr.bf16.mxu0 0
        %2200 = vmatpush1.bf16.msra.mxu0 0
        %2201 = vmatprep.subr.bf16.mxu0 0
        %2202 = vmatpush1.bf16.msra.mxu0 0
        %2203 = vmatprep.subr.bf16.mxu0 0
        %2204 = vmatpush1.bf16.msra.mxu0 0
        %2205 = vmatprep.mubr.bf16.mxu0 0
        %2206 = vmatmul.mubr.bf16.gmra.mrb[0].mxu0 %v2126
        %v2207 = vpop.f32.mrb[0].mxu0
        %v2208 = vadd.f32 %v2100, %v2207
        %v2209 = vpop.f32.mrb[0].mxu0
        %v2210 = vpop.f32.mrb[0].mxu0
        %v2211 = vadd.f32 %v2100, %v2210
        %v2212 = vpop.f32.mrb[0].mxu0
        %2213 = vmatprep.mubr.bf16.mxu0 0
        %2214 = vmatmul.mubr.bf16.gmra.mrb[0].mxu0 %v2129
        %v2215 = vpop.f32.mrb[0].mxu0
        %v2216 = vadd.f32 %v2100, %v2215
        %v2217 = vpop.f32.mrb[0].mxu0
        %v2218 = vpop.f32.mrb[0].mxu0
        %v2219 = vadd.f32 %v2100, %v2218
        %v2220 = vpop.f32.mrb[0].mxu0
        %2221 = vmatprep.mubr.bf16.mxu0 0
        %2222 = vmatmul.mubr.bf16.gmra.mrb[0].mxu0 %v2132
        %v2223 = vpop.f32.mrb[0].mxu0
        %v2224 = vadd.f32 %v2100, %v2223
        %v2225 = vpop.f32.mrb[0].mxu0
        %v2226 = vpop.f32.mrb[0].mxu0
        %v2227 = vadd.f32 %v2100, %v2226
        %v2228 = vpop.f32.mrb[0].mxu0
        %2229 = vmatprep.mubr.bf16.mxu0 0
        %2230 = vmatmul.mubr.bf16.gmra.mrb[0].mxu0 %v2135
        %v2231 = vpop.f32.mrb[0].mxu0
        %v2232 = vadd.f32 %v2100, %v2231
        %v2233 = vpop.f32.mrb[0].mxu0
        %v2234 = vpop.f32.mrb[0].mxu0
        %v2235 = vadd.f32 %v2100, %v2234
        %v2236 = vpop.f32.mrb[0].mxu0
        %2237 = vmatprep.mubr.bf16.mxu0 0
        %2238 = vmatmul.mubr.bf16.gmra.mrb[0].mxu0 %v2138
        %v2239 = vpop.f32.mrb[0].mxu0
        %v2240 = vadd.f32 %v2100, %v2239
        %v2241 = vpop.f32.mrb[0].mxu0
        %v2242 = vpop.f32.mrb[0].mxu0
        %v2243 = vadd.f32 %v2100, %v2242
        %v2244 = vpop.f32.mrb[0].mxu0
        %2245 = vmatprep.mubr.bf16.mxu0 0
        %2246 = vmatmul.mubr.bf16.gmra.mrb[0].mxu0 %v2141
        %v2247 = vpop.f32.mrb[0].mxu0
        %v2248 = vadd.f32 %v2100, %v2247
        %v2249 = vpop.f32.mrb[0].mxu0
        %v2250 = vpop.f32.mrb[0].mxu0
        %v2251 = vadd.f32 %v2100, %v2250
        %v2252 = vpop.f32.mrb[0].mxu0
        %2253 = vmatprep.mubr.bf16.mxu0 0
        %2254 = vmatmul.mubr.bf16.gmra.mrb[0].mxu0 %v2144
        %v2255 = vpop.f32.mrb[0].mxu0
        %v2256 = vadd.f32 %v2100, %v2255
        %v2257 = vpop.f32.mrb[0].mxu0
        %v2258 = vpop.f32.mrb[0].mxu0
        %v2259 = vadd.f32 %v2100, %v2258
        %v2260 = vpop.f32.mrb[0].mxu0
        %2261 = vmatprep.mubr.bf16.mxu0 0
        %2262 = vmatmul.mubr.bf16.gmra.mrb[0].mxu0 %v2147
        %v2263 = vpop.f32.mrb[0].mxu0
        %v2264 = vadd.f32 %v2100, %v2263
        %v2265 = vpop.f32.mrb[0].mxu0
        %v2266 = vpop.f32.mrb[0].mxu0
        %v2267 = vadd.f32 %v2100, %v2266
        %v2268 = vpop.f32.mrb[0].mxu0
        %2269 = vmatprep.mubr.bf16.mxu0 0
        %2270 = vmatmul.mubr.bf16.gmra.mrb[0].mxu0 %v2150
        %v2271 = vpop.f32.mrb[0].mxu0
        %v2272 = vadd.f32 %v2100, %v2271
        %v2273 = vpop.f32.mrb[0].mxu0
        %v2274 = vpop.f32.mrb[0].mxu0
        %v2275 = vadd.f32 %v2100, %v2274
        %v2276 = vpop.f32.mrb[0].mxu0
        %2277 = vmatprep.mubr.bf16.mxu0 0
        %2278 = vmatmul.mubr.bf16.gmra.mrb[0].mxu0 %v2153
        %v2279 = vpop.f32.mrb[0].mxu0
        %v2280 = vadd.f32 %v2100, %v2279
        %v2281 = vpop.f32.mrb[0].mxu0
        %v2282 = vpop.f32.mrb[0].mxu0
        %v2283 = vadd.f32 %v2100, %v2282
        %v2284 = vpop.f32.mrb[0].mxu0
        %2285 = vmatprep.mubr.bf16.mxu0 0
        %2286 = vmatmul.mubr.bf16.gmra.mrb[0].mxu0 %v2156
        %v2287 = vpop.f32.mrb[0].mxu0
        %v2288 = vadd.f32 %v2100, %v2287
        %v2289 = vpop.f32.mrb[0].mxu0
        %v2290 = vpop.f32.mrb[0].mxu0
        %v2291 = vadd.f32 %v2100, %v2290
        %v2292 = vpop.f32.mrb[0].mxu0
        %2293 = vmatprep.mubr.bf16.mxu0 0
        %2294 = vmatmul.mubr.bf16.gmra.mrb[0].mxu0 %v2159
        %v2295 = vpop.f32.mrb[0].mxu0
        %v2296 = vadd.f32 %v2100, %v2295
        %v2297 = vpop.f32.mrb[0].mxu0
        %v2298 = vpop.f32.mrb[0].mxu0
        %v2299 = vadd.f32 %v2100, %v2298
        %v2300 = vpop.f32.mrb[0].mxu0
        %2301 = vmatprep.mubr.bf16.mxu0 0
        %2302 = vmatmul.mubr.bf16.gmra.mrb[0].mxu0 %v2162
        %v2303 = vpop.f32.mrb[0].mxu0
        %v2304 = vadd.f32 %v2100, %v2303
        %v2305 = vpop.f32.mrb[0].mxu0
        %v2306 = vpop.f32.mrb[0].mxu0
        %v2307 = vadd.f32 %v2100, %v2306
        %v2308 = vpop.f32.mrb[0].mxu0
        %2309 = vmatprep.mubr.bf16.mxu0 0
        %2310 = vmatmul.mubr.bf16.gmra.mrb[0].mxu0 %v2165
        %v2311 = vpop.f32.mrb[0].mxu0
        %v2312 = vadd.f32 %v2100, %v2311
        %v2313 = vpop.f32.mrb[0].mxu0
        %v2314 = vpop.f32.mrb[0].mxu0
        %v2315 = vadd.f32 %v2100, %v2314
        %v2316 = vpop.f32.mrb[0].mxu0
        %2317 = vmatprep.mubr.bf16.mxu0 0
        %2318 = vmatmul.mubr.bf16.gmra.mrb[0].mxu0 %v2168
        %v2319 = vpop.f32.mrb[0].mxu0
        %v2320 = vadd.f32 %v2100, %v2319
        %v2321 = vpop.f32.mrb[0].mxu0
        %v2322 = vpop.f32.mrb[0].mxu0
        %v2323 = vadd.f32 %v2100, %v2322
        %v2324 = vpop.f32.mrb[0].mxu0
        %2325 = vmatprep.mubr.bf16.mxu0 0
        %2326 = vmatmul.mubr.bf16.gmra.mrb[0].mxu0 %v2171
        %v2327 = vpop.f32.mrb[0].mxu0
        %v2328 = vadd.f32 %v2100, %v2327
        %v2329 = vpop.f32.mrb[0].mxu0
        %v2330 = vpop.f32.mrb[0].mxu0
        %v2331 = vadd.f32 %v2100, %v2330
        %v2332 = vpop.f32.mrb[0].mxu0
        %2333 = vdwg.mxu0
        %vm2334 = vcmp.gt.f32.partialorder %v2208, 0.0
        %vm2335 = vcmp.gt.f32.partialorder %v2211, 0.0
        %vm2336 = vcmp.gt.f32.partialorder %v2216, 0.0
        %vm2337 = vcmp.gt.f32.partialorder %v2219, 0.0
        %vm2338 = vcmp.gt.f32.partialorder %v2224, 0.0
        %vm2339 = vcmp.gt.f32.partialorder %v2227, 0.0
        %vm2340 = vcmp.gt.f32.partialorder %v2232, 0.0
        %vm2341 = vcmp.gt.f32.partialorder %v2235, 0.0
        %vm2342 = vcmp.gt.f32.partialorder %v2240, 0.0
        %vm2343 = vcmp.gt.f32.partialorder %v2243, 0.0
        %vm2344 = vcmp.gt.f32.partialorder %v2248, 0.0
        %vm2345 = vcmp.gt.f32.partialorder %v2251, 0.0
        %vm2346 = vcmp.gt.f32.partialorder %v2256, 0.0
        %vm2347 = vcmp.gt.f32.partialorder %v2259, 0.0
        %vm2348 = vcmp.gt.f32.partialorder %v2264, 0.0
        %vm2349 = vcmp.gt.f32.partialorder %v2267, 0.0
        %vm2350 = vcmp.gt.f32.partialorder %v2272, 0.0
        %vm2351 = vcmp.gt.f32.partialorder %v2275, 0.0
        %vm2352 = vcmp.gt.f32.partialorder %v2280, 0.0
        %vm2353 = vcmp.gt.f32.partialorder %v2283, 0.0
        %vm2354 = vcmp.gt.f32.partialorder %v2288, 0.0
        %vm2355 = vcmp.gt.f32.partialorder %v2291, 0.0
        %vm2356 = vcmp.gt.f32.partialorder %v2296, 0.0
        %vm2357 = vcmp.gt.f32.partialorder %v2299, 0.0
        %vm2358 = vcmp.gt.f32.partialorder %v2304, 0.0
        %vm2359 = vcmp.gt.f32.partialorder %v2307, 0.0
        %vm2360 = vcmp.gt.f32.partialorder %v2312, 0.0
        %vm2361 = vcmp.gt.f32.partialorder %v2315, 0.0
        %vm2362 = vcmp.gt.f32.partialorder %v2320, 0.0
        %vm2363 = vcmp.gt.f32.partialorder %v2323, 0.0
        %vm2364 = vcmp.gt.f32.partialorder %v2328, 0.0
        %vm2365 = vcmp.gt.f32.partialorder %v2331, 0.0
        %v2366 = vmul.f32 %v2208, 0.01
        %v2367 = vmul.f32 %v2211, 0.01
        %v2368 = vmul.f32 %v2216, 0.01
        %v2369 = vmul.f32 %v2219, 0.01
        %v2370 = vmul.f32 %v2224, 0.01
        %v2371 = vmul.f32 %v2227, 0.01
        %v2372 = vmul.f32 %v2232, 0.01
        %v2373 = vmul.f32 %v2235, 0.01
        %v2374 = vmul.f32 %v2240, 0.01
        %v2375 = vmul.f32 %v2243, 0.01
        %v2376 = vmul.f32 %v2248, 0.01
        %v2377 = vmul.f32 %v2251, 0.01
        %v2378 = vmul.f32 %v2256, 0.01
        %v2379 = vmul.f32 %v2259, 0.01
        %v2380 = vmul.f32 %v2264, 0.01
        %v2381 = vmul.f32 %v2267, 0.01
        %v2382 = vmul.f32 %v2272, 0.01
        %v2383 = vmul.f32 %v2275, 0.01
        %v2384 = vmul.f32 %v2280, 0.01
        %v2385 = vmul.f32 %v2283, 0.01
        %v2386 = vmul.f32 %v2288, 0.01
        %v2387 = vmul.f32 %v2291, 0.01
        %v2388 = vmul.f32 %v2296, 0.01
        %v2389 = vmul.f32 %v2299, 0.01
        %v2390 = vmul.f32 %v2304, 0.01
        %v2391 = vmul.f32 %v2307, 0.01
        %v2392 = vmul.f32 %v2312, 0.01
        %v2393 = vmul.f32 %v2315, 0.01
        %v2394 = vmul.f32 %v2320, 0.01
        %v2395 = vmul.f32 %v2323, 0.01
        %v2396 = vmul.f32 %v2328, 0.01
        %v2397 = vmul.f32 %v2331, 0.01
        %v2398 = vsel %vm2334, %v2208, %v2366
        %v2399 = vsel %vm2335, %v2211, %v2367
        %v2400 = vsel %vm2336, %v2216, %v2368
        %v2401 = vsel %vm2337, %v2219, %v2369
        %v2402 = vsel %vm2338, %v2224, %v2370
        %v2403 = vsel %vm2339, %v2227, %v2371
        %v2404 = vsel %vm2340, %v2232, %v2372
        %v2405 = vsel %vm2341, %v2235, %v2373
        %v2406 = vsel %vm2342, %v2240, %v2374
        %v2407 = vsel %vm2343, %v2243, %v2375
        %v2408 = vsel %vm2344, %v2248, %v2376
        %v2409 = vsel %vm2345, %v2251, %v2377
        %v2410 = vsel %vm2346, %v2256, %v2378
        %v2411 = vsel %vm2347, %v2259, %v2379
        %v2412 = vsel %vm2348, %v2264, %v2380
        %v2413 = vsel %vm2349, %v2267, %v2381
        %v2414 = vsel %vm2350, %v2272, %v2382
        %v2415 = vsel %vm2351, %v2275, %v2383
        %v2416 = vsel %vm2352, %v2280, %v2384
        %v2417 = vsel %vm2353, %v2283, %v2385
        %v2418 = vsel %vm2354, %v2288, %v2386
        %v2419 = vsel %vm2355, %v2291, %v2387
        %v2420 = vsel %vm2356, %v2296, %v2388
        %v2421 = vsel %vm2357, %v2299, %v2389
        %v2422 = vsel %vm2358, %v2304, %v2390
        %v2423 = vsel %vm2359, %v2307, %v2391
        %v2424 = vsel %vm2360, %v2312, %v2392
        %v2425 = vsel %vm2361, %v2315, %v2393
        %v2426 = vsel %vm2362, %v2320, %v2394
        %v2427 = vsel %vm2363, %v2323, %v2395
        %v2428 = vsel %vm2364, %v2328, %v2396
        %v2429 = vsel %vm2365, %v2331, %v2397
        %v2430 = vlaneseq
        %v2431 = vshrl.u32 %v2430, 7
        %v2432 = vsub.s32 7, %v2431
        %v2433 = vrot.slane %v328, %v2432
        %v2434 = vmul.f32 %v2398, %v2433
        %v2435 = vmul.f32 %v2399, %v2433
        %v2436 = vmul.f32 %v2400, %v2433
        %v2437 = vmul.f32 %v2401, %v2433
        %v2438 = vmul.f32 %v2402, %v2433
        %v2439 = vmul.f32 %v2403, %v2433
        %v2440 = vmul.f32 %v2404, %v2433
        %v2441 = vmul.f32 %v2405, %v2433
        %v2442 = vmul.f32 %v2406, %v2433
        %v2443 = vmul.f32 %v2407, %v2433
        %v2444 = vmul.f32 %v2408, %v2433
        %v2445 = vmul.f32 %v2409, %v2433
        %v2446 = vmul.f32 %v2410, %v2433
        %v2447 = vmul.f32 %v2411, %v2433
        %v2448 = vmul.f32 %v2412, %v2433
        %v2449 = vmul.f32 %v2413, %v2433
        %v2450 = vmul.f32 %v2414, %v2433
        %v2451 = vmul.f32 %v2415, %v2433
        %v2452 = vmul.f32 %v2416, %v2433
        %v2453 = vmul.f32 %v2417, %v2433
        %v2454 = vmul.f32 %v2418, %v2433
        %v2455 = vmul.f32 %v2419, %v2433
        %v2456 = vmul.f32 %v2420, %v2433
        %v2457 = vmul.f32 %v2421, %v2433
        %v2458 = vmul.f32 %v2422, %v2433
        %v2459 = vmul.f32 %v2423, %v2433
        %v2460 = vmul.f32 %v2424, %v2433
        %v2461 = vmul.f32 %v2425, %v2433
        %v2462 = vmul.f32 %v2426, %v2433
        %v2463 = vmul.f32 %v2427, %v2433
        %v2464 = vmul.f32 %v2428, %v2433
        %v2465 = vmul.f32 %v2429, %v2433
        %v2466 = vsel %vm1767, %v2434, 0.0
        %2467 = vadd.xlane.f32.xlu0 %v2466
        %v2468 = vpop.xlane.xlu0 %2467
        %v2469 = vsel %vm1767, %v2435, 0.0
        %2470 = vadd.xlane.f32.xlu0 %v2469
        %v2471 = vpop.xlane.xlu0 %2470
        %v2472 = vsel %vm1767, %v2436, 0.0
        %2473 = vadd.xlane.f32.xlu0 %v2472
        %v2474 = vpop.xlane.xlu0 %2473
        %v2475 = vsel %vm1767, %v2437, 0.0
        %2476 = vadd.xlane.f32.xlu0 %v2475
        %v2477 = vpop.xlane.xlu0 %2476
        %v2478 = vsel %vm1767, %v2438, 0.0
        %2479 = vadd.xlane.f32.xlu0 %v2478
        %v2480 = vpop.xlane.xlu0 %2479
        %v2481 = vsel %vm1767, %v2439, 0.0
        %2482 = vadd.xlane.f32.xlu0 %v2481
        %v2483 = vpop.xlane.xlu0 %2482
        %v2484 = vsel %vm1767, %v2440, 0.0
        %2485 = vadd.xlane.f32.xlu0 %v2484
        %v2486 = vpop.xlane.xlu0 %2485
        %v2487 = vsel %vm1767, %v2441, 0.0
        %2488 = vadd.xlane.f32.xlu0 %v2487
        %v2489 = vpop.xlane.xlu0 %2488
        %v2490 = vsel %vm1767, %v2442, 0.0
        %2491 = vadd.xlane.f32.xlu0 %v2490
        %v2492 = vpop.xlane.xlu0 %2491
        %v2493 = vsel %vm1767, %v2443, 0.0
        %2494 = vadd.xlane.f32.xlu0 %v2493
        %v2495 = vpop.xlane.xlu0 %2494
        %v2496 = vsel %vm1767, %v2444, 0.0
        %2497 = vadd.xlane.f32.xlu0 %v2496
        %v2498 = vpop.xlane.xlu0 %2497
        %v2499 = vsel %vm1767, %v2445, 0.0
        %2500 = vadd.xlane.f32.xlu0 %v2499
        %v2501 = vpop.xlane.xlu0 %2500
        %v2502 = vsel %vm1767, %v2446, 0.0
        %2503 = vadd.xlane.f32.xlu0 %v2502
        %v2504 = vpop.xlane.xlu0 %2503
        %v2505 = vsel %vm1767, %v2447, 0.0
        %2506 = vadd.xlane.f32.xlu0 %v2505
        %v2507 = vpop.xlane.xlu0 %2506
        %v2508 = vsel %vm1767, %v2448, 0.0
        %2509 = vadd.xlane.f32.xlu0 %v2508
        %v2510 = vpop.xlane.xlu0 %2509
        %v2511 = vsel %vm1767, %v2449, 0.0
        %2512 = vadd.xlane.f32.xlu0 %v2511
        %v2513 = vpop.xlane.xlu0 %2512
        %v2514 = vsel %vm1767, %v2450, 0.0
        %2515 = vadd.xlane.f32.xlu0 %v2514
        %v2516 = vpop.xlane.xlu0 %2515
        %v2517 = vsel %vm1767, %v2451, 0.0
        %2518 = vadd.xlane.f32.xlu0 %v2517
        %v2519 = vpop.xlane.xlu0 %2518
        %v2520 = vsel %vm1767, %v2452, 0.0
        %2521 = vadd.xlane.f32.xlu0 %v2520
        %v2522 = vpop.xlane.xlu0 %2521
        %v2523 = vsel %vm1767, %v2453, 0.0
        %2524 = vadd.xlane.f32.xlu0 %v2523
        %v2525 = vpop.xlane.xlu0 %2524
        %v2526 = vsel %vm1767, %v2454, 0.0
        %2527 = vadd.xlane.f32.xlu0 %v2526
        %v2528 = vpop.xlane.xlu0 %2527
        %v2529 = vsel %vm1767, %v2455, 0.0
        %2530 = vadd.xlane.f32.xlu0 %v2529
        %v2531 = vpop.xlane.xlu0 %2530
        %v2532 = vsel %vm1767, %v2456, 0.0
        %2533 = vadd.xlane.f32.xlu0 %v2532
        %v2534 = vpop.xlane.xlu0 %2533
        %v2535 = vsel %vm1767, %v2457, 0.0
        %2536 = vadd.xlane.f32.xlu0 %v2535
        %v2537 = vpop.xlane.xlu0 %2536
        %v2538 = vsel %vm1767, %v2458, 0.0
        %2539 = vadd.xlane.f32.xlu0 %v2538
        %v2540 = vpop.xlane.xlu0 %2539
        %v2541 = vsel %vm1767, %v2459, 0.0
        %2542 = vadd.xlane.f32.xlu0 %v2541
        %v2543 = vpop.xlane.xlu0 %2542
        %v2544 = vsel %vm1767, %v2460, 0.0
        %2545 = vadd.xlane.f32.xlu0 %v2544
        %v2546 = vpop.xlane.xlu0 %2545
        %v2547 = vsel %vm1767, %v2461, 0.0
        %2548 = vadd.xlane.f32.xlu0 %v2547
        %v2549 = vpop.xlane.xlu0 %2548
        %v2550 = vsel %vm1767, %v2462, 0.0
        %2551 = vadd.xlane.f32.xlu0 %v2550
        %v2552 = vpop.xlane.xlu0 %2551
        %v2553 = vsel %vm1767, %v2463, 0.0
        %2554 = vadd.xlane.f32.xlu0 %v2553
        %v2555 = vpop.xlane.xlu0 %2554
        %v2556 = vsel %vm1767, %v2464, 0.0
        %2557 = vadd.xlane.f32.xlu0 %v2556
        %v2558 = vpop.xlane.xlu0 %2557
        %v2559 = vsel %vm1767, %v2465, 0.0
        %2560 = vadd.xlane.f32.xlu0 %v2559
        %v2561 = vpop.xlane.xlu0 %2560
        %v2562 = vlaneseq
        %v2563 = vshrl.u32 %v2562, 7
        %v2564 = vsub.s32 6, %v2563
        %v2565 = vrot.slane %v328, %v2564
        %v2566 = vadd.f32 %v2468, %v2565
        %v2567 = vadd.f32 %v2471, %v2565
        %v2568 = vadd.f32 %v2474, %v2565
        %v2569 = vadd.f32 %v2477, %v2565
        %v2570 = vadd.f32 %v2480, %v2565
        %v2571 = vadd.f32 %v2483, %v2565
        %v2572 = vadd.f32 %v2486, %v2565
        %v2573 = vadd.f32 %v2489, %v2565
        %v2574 = vadd.f32 %v2492, %v2565
        %v2575 = vadd.f32 %v2495, %v2565
        %v2576 = vadd.f32 %v2498, %v2565
        %v2577 = vadd.f32 %v2501, %v2565
        %v2578 = vadd.f32 %v2504, %v2565
        %v2579 = vadd.f32 %v2507, %v2565
        %v2580 = vadd.f32 %v2510, %v2565
        %v2581 = vadd.f32 %v2513, %v2565
        %v2582 = vadd.f32 %v2516, %v2565
        %v2583 = vadd.f32 %v2519, %v2565
        %v2584 = vadd.f32 %v2522, %v2565
        %v2585 = vadd.f32 %v2525, %v2565
        %v2586 = vadd.f32 %v2528, %v2565
        %v2587 = vadd.f32 %v2531, %v2565
        %v2588 = vadd.f32 %v2534, %v2565
        %v2589 = vadd.f32 %v2537, %v2565
        %v2590 = vadd.f32 %v2540, %v2565
        %v2591 = vadd.f32 %v2543, %v2565
        %v2592 = vadd.f32 %v2546, %v2565
        %v2593 = vadd.f32 %v2549, %v2565
        %v2594 = vadd.f32 %v2552, %v2565
        %v2595 = vadd.f32 %v2555, %v2565
        %v2596 = vadd.f32 %v2558, %v2565
        %v2597 = vadd.f32 %v2561, %v2565
        %vm2598 = vcmask 7168
        %2599 = vst.msk [vmem:[%s307] sm:$0xff] %vm2598, %v2566
        %2600 = vst.msk [vmem:[%s307 + $0x8] sm:$0xff] %vm2598, %v2567
        %2601 = vst.msk [vmem:[%s307 + $0x10] sm:$0xff] %vm2598, %v2568
        %2602 = vst.msk [vmem:[%s307 + $0x18] sm:$0xff] %vm2598, %v2569
        %2603 = vst.msk [vmem:[%s307 + $0x20] sm:$0xff] %vm2598, %v2570
        %2604 = vst.msk [vmem:[%s307 + $0x28] sm:$0xff] %vm2598, %v2571
        %2605 = vst.msk [vmem:[%s307 + $0x30] sm:$0xff] %vm2598, %v2572
        %2606 = vst.msk [vmem:[%s307 + $0x38] sm:$0xff] %vm2598, %v2573
        %2607 = vst.msk [vmem:[%s307 + $0x40] sm:$0xff] %vm2598, %v2574
        %2608 = vst.msk [vmem:[%s307 + $0x48] sm:$0xff] %vm2598, %v2575
        %2609 = vst.msk [vmem:[%s307 + $0x50] sm:$0xff] %vm2598, %v2576
        %2610 = vst.msk [vmem:[%s307 + $0x58] sm:$0xff] %vm2598, %v2577
        %2611 = vst.msk [vmem:[%s307 + $0x60] sm:$0xff] %vm2598, %v2578
        %2612 = vst.msk [vmem:[%s307 + $0x68] sm:$0xff] %vm2598, %v2579
        %2613 = vst.msk [vmem:[%s307 + $0x70] sm:$0xff] %vm2598, %v2580
        %2614 = vst.msk [vmem:[%s307 + $0x78] sm:$0xff] %vm2598, %v2581
        %2615 = vst.msk [vmem:[%s307 + $0x80] sm:$0xff] %vm2598, %v2582
        %2616 = vst.msk [vmem:[%s307 + $0x88] sm:$0xff] %vm2598, %v2583
        %2617 = vst.msk [vmem:[%s307 + $0x90] sm:$0xff] %vm2598, %v2584
        %2618 = vst.msk [vmem:[%s307 + $0x98] sm:$0xff] %vm2598, %v2585
        %2619 = vst.msk [vmem:[%s307 + $0xa0] sm:$0xff] %vm2598, %v2586
        %2620 = vst.msk [vmem:[%s307 + $0xa8] sm:$0xff] %vm2598, %v2587
        %2621 = vst.msk [vmem:[%s307 + $0xb0] sm:$0xff] %vm2598, %v2588
        %2622 = vst.msk [vmem:[%s307 + $0xb8] sm:$0xff] %vm2598, %v2589
        %2623 = vst.msk [vmem:[%s307 + $0xc0] sm:$0xff] %vm2598, %v2590
        %2624 = vst.msk [vmem:[%s307 + $0xc8] sm:$0xff] %vm2598, %v2591
        %2625 = vst.msk [vmem:[%s307 + $0xd0] sm:$0xff] %vm2598, %v2592
        %2626 = vst.msk [vmem:[%s307 + $0xd8] sm:$0xff] %vm2598, %v2593
        %2627 = vst.msk [vmem:[%s307 + $0xe0] sm:$0xff] %vm2598, %v2594
        %2628 = vst.msk [vmem:[%s307 + $0xe8] sm:$0xff] %vm2598, %v2595
        %2629 = vst.msk [vmem:[%s307 + $0xf0] sm:$0xff] %vm2598, %v2596
        %2630 = vst.msk [vmem:[%s307 + $0xf8] sm:$0xff] %vm2598, %v2597
        %s2631 = sand.u32 %s200, 1
        %s2632 = sand.u32 %s200, 1
        %s2633 = smul.addr %s2632, 256
        %s2634 = scalar_lea.vmem [#allocation2], %s2633
        // Predicated region
        $region53: #{regression_nn_forward.1} parent=51 // pred_check
          %p2635 = pneg %p210
        $region54: #{regression_nn_forward.1} parent=51 // pred_check_branch
          %2637 = sbr.rel (%p2635) target = $region56
        $region55: #{regression_nn_forward.1} parent=51 // pred_region
          %s2638 = smul.u32 32, %s19
          %s2639 = ssub.s32 125, %s2638
          %p2640 = scmp.lt.s32.totalorder %s2639, 32
          %s2641 = scalar_select %p2640, %s2639, 32
          %s2642 = smul.u32 128, %s2641
          %p2643 = scmp.ne.s32.totalorder 0, %s2642
          %s2644 = smul.addr %s2638, 8
          %s2645 = scalar_lea.vmem %s8, %s2644
          // Predicated region
          $region57: #{regression_nn_forward.1} parent=55 // pred_check
            %p2646 = pneg %p2643
          $region58: #{regression_nn_forward.1} parent=55 // pred_check_branch
            %2648 = sbr.rel (%p2646) target = $region60
          $region59: #{regression_nn_forward.1} parent=55 // pred_region
            // Predicated region
            $region61: #{regression_nn_forward.1} parent=59 // pred_check
              _
            $region62: #{regression_nn_forward.1} parent=59 // pred_check_branch
              %2650 = sbr.rel (0) target = $region64
            $region63: #{regression_nn_forward.1} parent=59 // pred_region
              // Predicated region
              $region83: #{regression_nn_forward.1} parent=63 // pred_check
                _
              $region84: #{regression_nn_forward.1} parent=63 // pred_check_branch
                %2761 = sbr.rel (0) target = $region86
              $region85: #{regression_nn_forward.1} parent=63 // pred_region
                %s2762 = sshrl.u32 %s2641, 5
                // While loop
                $region87: #{regression_nn_forward.1} parent=85 // loop_pre_header
                  _
                $region88: #{regression_nn_forward.1} parent=85 // loop_header
                  %s2764 = sphi 0, %s2766
                  %p2765 = scmp.ge.s32.totalorder %s2764, %s2762
                  %s2769 = sphi 0, %s2838
                  %s2770 = sphi %s2634, %s2841
                  %s2771 = sphi %s2645, %s2842
                $region89: #{regression_nn_forward.1} parent=85 // loop_header_branch
                  %2768 = sbr.rel (%p2765) target = $region93
                $region90: #{regression_nn_forward.1} parent=85 // loop_body
                  %v2772 = vld [vmem:[%s2770] sm:$0xff]
                  %2773 = vst [vmem:[%s2771] sm:$0xff] %v2772
                  %v2774 = vld [vmem:[%s2770 + $0x8] sm:$0xff]
                  %2775 = vst [vmem:[%s2771 + $0x8] sm:$0xff] %v2774
                  %v2776 = vld [vmem:[%s2770 + $0x10] sm:$0xff]
                  %2777 = vst [vmem:[%s2771 + $0x10] sm:$0xff] %v2776
                  %v2778 = vld [vmem:[%s2770 + $0x18] sm:$0xff]
                  %2779 = vst [vmem:[%s2771 + $0x18] sm:$0xff] %v2778
                  %v2780 = vld [vmem:[%s2770 + $0x20] sm:$0xff]
                  %2781 = vst [vmem:[%s2771 + $0x20] sm:$0xff] %v2780
                  %v2782 = vld [vmem:[%s2770 + $0x28] sm:$0xff]
                  %2783 = vst [vmem:[%s2771 + $0x28] sm:$0xff] %v2782
                  %v2784 = vld [vmem:[%s2770 + $0x30] sm:$0xff]
                  %2785 = vst [vmem:[%s2771 + $0x30] sm:$0xff] %v2784
                  %v2786 = vld [vmem:[%s2770 + $0x38] sm:$0xff]
                  %2787 = vst [vmem:[%s2771 + $0x38] sm:$0xff] %v2786
                  %v2788 = vld [vmem:[%s2770 + $0x40] sm:$0xff]
                  %2789 = vst [vmem:[%s2771 + $0x40] sm:$0xff] %v2788
                  %v2790 = vld [vmem:[%s2770 + $0x48] sm:$0xff]
                  %2791 = vst [vmem:[%s2771 + $0x48] sm:$0xff] %v2790
                  %v2792 = vld [vmem:[%s2770 + $0x50] sm:$0xff]
                  %2793 = vst [vmem:[%s2771 + $0x50] sm:$0xff] %v2792
                  %v2794 = vld [vmem:[%s2770 + $0x58] sm:$0xff]
                  %2795 = vst [vmem:[%s2771 + $0x58] sm:$0xff] %v2794
                  %v2796 = vld [vmem:[%s2770 + $0x60] sm:$0xff]
                  %2797 = vst [vmem:[%s2771 + $0x60] sm:$0xff] %v2796
                  %v2798 = vld [vmem:[%s2770 + $0x68] sm:$0xff]
                  %2799 = vst [vmem:[%s2771 + $0x68] sm:$0xff] %v2798
                  %v2800 = vld [vmem:[%s2770 + $0x70] sm:$0xff]
                  %2801 = vst [vmem:[%s2771 + $0x70] sm:$0xff] %v2800
                  %v2802 = vld [vmem:[%s2770 + $0x78] sm:$0xff]
                  %2803 = vst [vmem:[%s2771 + $0x78] sm:$0xff] %v2802
                  %v2804 = vld [vmem:[%s2770 + $0x80] sm:$0xff]
                  %2805 = vst [vmem:[%s2771 + $0x80] sm:$0xff] %v2804
                  %v2806 = vld [vmem:[%s2770 + $0x88] sm:$0xff]
                  %2807 = vst [vmem:[%s2771 + $0x88] sm:$0xff] %v2806
                  %v2808 = vld [vmem:[%s2770 + $0x90] sm:$0xff]
                  %2809 = vst [vmem:[%s2771 + $0x90] sm:$0xff] %v2808
                  %v2810 = vld [vmem:[%s2770 + $0x98] sm:$0xff]
                  %2811 = vst [vmem:[%s2771 + $0x98] sm:$0xff] %v2810
                  %v2812 = vld [vmem:[%s2770 + $0xa0] sm:$0xff]
                  %2813 = vst [vmem:[%s2771 + $0xa0] sm:$0xff] %v2812
                  %v2814 = vld [vmem:[%s2770 + $0xa8] sm:$0xff]
                  %2815 = vst [vmem:[%s2771 + $0xa8] sm:$0xff] %v2814
                  %v2816 = vld [vmem:[%s2770 + $0xb0] sm:$0xff]
                  %2817 = vst [vmem:[%s2771 + $0xb0] sm:$0xff] %v2816
                  %v2818 = vld [vmem:[%s2770 + $0xb8] sm:$0xff]
                  %2819 = vst [vmem:[%s2771 + $0xb8] sm:$0xff] %v2818
                  %v2820 = vld [vmem:[%s2770 + $0xc0] sm:$0xff]
                  %2821 = vst [vmem:[%s2771 + $0xc0] sm:$0xff] %v2820
                  %v2822 = vld [vmem:[%s2770 + $0xc8] sm:$0xff]
                  %2823 = vst [vmem:[%s2771 + $0xc8] sm:$0xff] %v2822
                  %v2824 = vld [vmem:[%s2770 + $0xd0] sm:$0xff]
                  %2825 = vst [vmem:[%s2771 + $0xd0] sm:$0xff] %v2824
                  %v2826 = vld [vmem:[%s2770 + $0xd8] sm:$0xff]
                  %2827 = vst [vmem:[%s2771 + $0xd8] sm:$0xff] %v2826
                  %v2828 = vld [vmem:[%s2770 + $0xe0] sm:$0xff]
                  %2829 = vst [vmem:[%s2771 + $0xe0] sm:$0xff] %v2828
                  %v2830 = vld [vmem:[%s2770 + $0xe8] sm:$0xff]
                  %2831 = vst [vmem:[%s2771 + $0xe8] sm:$0xff] %v2830
                  %v2832 = vld [vmem:[%s2770 + $0xf0] sm:$0xff]
                  %2833 = vst [vmem:[%s2771 + $0xf0] sm:$0xff] %v2832
                  %v2834 = vld [vmem:[%s2770 + $0xf8] sm:$0xff]
                  %2835 = vst [vmem:[%s2771 + $0xf8] sm:$0xff] %v2834
                  %s2836 = sadd.s32 1, %s2769
                  %p2837 = scmp.ge.s32.totalorder %s2836, %s2762
                  %s2838 = scalar_select %p2837, 0, %s2836
                  %s2839 = smul.u32 %s2838, 256
                  %s2840 = smul.u32 %s2838, 256
                  %s2841 = scalar_lea.vmem %s2634, %s2839 [#allocation2]
                  %s2842 = scalar_lea.vmem %s2645, %s2840
                $region91: #{regression_nn_forward.1} parent=85 // loop_footer
                  %s2766 = sadd.s32 %s2764, 1
                $region92: #{regression_nn_forward.1} parent=85 // loop_footer_branch
                  %2763 = sbr.rel target = $region88
                $region93: #{regression_nn_forward.1} parent=85 // loop_exit
                  _
                %s2843 = sshrl.u32 %s2641, 5
                %s2844 = sand.u32 %s2641, 31
                %s2845 = smul.u32 %s2843, 32
                %s2846 = smul.u32 8, %s2845
                %s2847 = scalar_lea.vmem %s2634, %s2846 [#allocation2]
                %s2848 = smul.u32 8, %s2845
                %s2849 = scalar_lea.vmem %s2645, %s2848
                // While loop
                $region94: #{regression_nn_forward.1} parent=85 // loop_pre_header
                  _
                $region95: #{regression_nn_forward.1} parent=85 // loop_header
                  %s2851 = sphi 0, %s2853
                  %p2852 = scmp.ge.s32.totalorder %s2851, %s2844
                  %s2856 = sphi 0, %s2863
                  %s2857 = sphi %s2847, %s2866
                  %s2858 = sphi %s2849, %s2867
                $region96: #{regression_nn_forward.1} parent=85 // loop_header_branch
                  %2855 = sbr.rel (%p2852) target = $region100
                $region97: #{regression_nn_forward.1} parent=85 // loop_body
                  %v2859 = vld [vmem:[%s2857] sm:$0xff]
                  %2860 = vst [vmem:[%s2858] sm:$0xff] %v2859
                  %s2861 = sadd.s32 1, %s2856
                  %p2862 = scmp.ge.s32.totalorder %s2861, %s2844
                  %s2863 = scalar_select %p2862, 0, %s2861
                  %s2864 = smul.u32 %s2863, 8
                  %s2865 = smul.u32 %s2863, 8
                  %s2866 = scalar_lea.vmem %s2847, %s2864 [#allocation2]
                  %s2867 = scalar_lea.vmem %s2849, %s2865
                $region98: #{regression_nn_forward.1} parent=85 // loop_footer
                  %s2853 = sadd.s32 %s2851, 1
                $region99: #{regression_nn_forward.1} parent=85 // loop_footer_branch
                  %2850 = sbr.rel target = $region95
                $region100: #{regression_nn_forward.1} parent=85 // loop_exit
                  _
              $region86: #{regression_nn_forward.1} parent=63 // pred_fallthru
                _
              // Predicated region
              $region101: #{regression_nn_forward.1} parent=63 // pred_check
                _
              $region102: #{regression_nn_forward.1} parent=63 // pred_check_branch
                %2869 = sbr.rel target = $region104
              $region103: #{regression_nn_forward.1} parent=63 // pred_region
                _
              $region104: #{regression_nn_forward.1} parent=63 // pred_fallthru
                _
            $region64: #{regression_nn_forward.1} parent=59 // pred_fallthru
              _
            // Predicated region
            $region65: #{regression_nn_forward.1} parent=59 // pred_check
              _
            $region66: #{regression_nn_forward.1} parent=59 // pred_check_branch
              %2652 = sbr.rel target = $region68
            $region67: #{regression_nn_forward.1} parent=59 // pred_region
              %s2654 = sshrl.u32 %s2641, 5
              // While loop
              $region69: #{regression_nn_forward.1} parent=67 // loop_pre_header
                _
              $region70: #{regression_nn_forward.1} parent=67 // loop_header
                %s2656 = sphi 0, %s2658
                %p2657 = scmp.ge.s32.totalorder %s2656, %s2654
                %s2661 = sphi 0, %s2730
                %s2662 = sphi %s2634, %s2733
                %s2663 = sphi %s2645, %s2734
              $region71: #{regression_nn_forward.1} parent=67 // loop_header_branch
                %2660 = sbr.rel (%p2657) target = $region75
              $region72: #{regression_nn_forward.1} parent=67 // loop_body
                %v2664 = vld [vmem:[%s2662] sm:$0xff]
                %2665 = vst [vmem:[%s2663] sm:$0xff] %v2664
                %v2666 = vld [vmem:[%s2662 + $0x8] sm:$0xff]
                %2667 = vst [vmem:[%s2663 + $0x8] sm:$0xff] %v2666
                %v2668 = vld [vmem:[%s2662 + $0x10] sm:$0xff]
                %2669 = vst [vmem:[%s2663 + $0x10] sm:$0xff] %v2668
                %v2670 = vld [vmem:[%s2662 + $0x18] sm:$0xff]
                %2671 = vst [vmem:[%s2663 + $0x18] sm:$0xff] %v2670
                %v2672 = vld [vmem:[%s2662 + $0x20] sm:$0xff]
                %2673 = vst [vmem:[%s2663 + $0x20] sm:$0xff] %v2672
                %v2674 = vld [vmem:[%s2662 + $0x28] sm:$0xff]
                %2675 = vst [vmem:[%s2663 + $0x28] sm:$0xff] %v2674
                %v2676 = vld [vmem:[%s2662 + $0x30] sm:$0xff]
                %2677 = vst [vmem:[%s2663 + $0x30] sm:$0xff] %v2676
                %v2678 = vld [vmem:[%s2662 + $0x38] sm:$0xff]
                %2679 = vst [vmem:[%s2663 + $0x38] sm:$0xff] %v2678
                %v2680 = vld [vmem:[%s2662 + $0x40] sm:$0xff]
                %2681 = vst [vmem:[%s2663 + $0x40] sm:$0xff] %v2680
                %v2682 = vld [vmem:[%s2662 + $0x48] sm:$0xff]
                %2683 = vst [vmem:[%s2663 + $0x48] sm:$0xff] %v2682
                %v2684 = vld [vmem:[%s2662 + $0x50] sm:$0xff]
                %2685 = vst [vmem:[%s2663 + $0x50] sm:$0xff] %v2684
                %v2686 = vld [vmem:[%s2662 + $0x58] sm:$0xff]
                %2687 = vst [vmem:[%s2663 + $0x58] sm:$0xff] %v2686
                %v2688 = vld [vmem:[%s2662 + $0x60] sm:$0xff]
                %2689 = vst [vmem:[%s2663 + $0x60] sm:$0xff] %v2688
                %v2690 = vld [vmem:[%s2662 + $0x68] sm:$0xff]
                %2691 = vst [vmem:[%s2663 + $0x68] sm:$0xff] %v2690
                %v2692 = vld [vmem:[%s2662 + $0x70] sm:$0xff]
                %2693 = vst [vmem:[%s2663 + $0x70] sm:$0xff] %v2692
                %v2694 = vld [vmem:[%s2662 + $0x78] sm:$0xff]
                %2695 = vst [vmem:[%s2663 + $0x78] sm:$0xff] %v2694
                %v2696 = vld [vmem:[%s2662 + $0x80] sm:$0xff]
                %2697 = vst [vmem:[%s2663 + $0x80] sm:$0xff] %v2696
                %v2698 = vld [vmem:[%s2662 + $0x88] sm:$0xff]
                %2699 = vst [vmem:[%s2663 + $0x88] sm:$0xff] %v2698
                %v2700 = vld [vmem:[%s2662 + $0x90] sm:$0xff]
                %2701 = vst [vmem:[%s2663 + $0x90] sm:$0xff] %v2700
                %v2702 = vld [vmem:[%s2662 + $0x98] sm:$0xff]
                %2703 = vst [vmem:[%s2663 + $0x98] sm:$0xff] %v2702
                %v2704 = vld [vmem:[%s2662 + $0xa0] sm:$0xff]
                %2705 = vst [vmem:[%s2663 + $0xa0] sm:$0xff] %v2704
                %v2706 = vld [vmem:[%s2662 + $0xa8] sm:$0xff]
                %2707 = vst [vmem:[%s2663 + $0xa8] sm:$0xff] %v2706
                %v2708 = vld [vmem:[%s2662 + $0xb0] sm:$0xff]
                %2709 = vst [vmem:[%s2663 + $0xb0] sm:$0xff] %v2708
                %v2710 = vld [vmem:[%s2662 + $0xb8] sm:$0xff]
                %2711 = vst [vmem:[%s2663 + $0xb8] sm:$0xff] %v2710
                %v2712 = vld [vmem:[%s2662 + $0xc0] sm:$0xff]
                %2713 = vst [vmem:[%s2663 + $0xc0] sm:$0xff] %v2712
                %v2714 = vld [vmem:[%s2662 + $0xc8] sm:$0xff]
                %2715 = vst [vmem:[%s2663 + $0xc8] sm:$0xff] %v2714
                %v2716 = vld [vmem:[%s2662 + $0xd0] sm:$0xff]
                %2717 = vst [vmem:[%s2663 + $0xd0] sm:$0xff] %v2716
                %v2718 = vld [vmem:[%s2662 + $0xd8] sm:$0xff]
                %2719 = vst [vmem:[%s2663 + $0xd8] sm:$0xff] %v2718
                %v2720 = vld [vmem:[%s2662 + $0xe0] sm:$0xff]
                %2721 = vst [vmem:[%s2663 + $0xe0] sm:$0xff] %v2720
                %v2722 = vld [vmem:[%s2662 + $0xe8] sm:$0xff]
                %2723 = vst [vmem:[%s2663 + $0xe8] sm:$0xff] %v2722
                %v2724 = vld [vmem:[%s2662 + $0xf0] sm:$0xff]
                %2725 = vst [vmem:[%s2663 + $0xf0] sm:$0xff] %v2724
                %v2726 = vld [vmem:[%s2662 + $0xf8] sm:$0xff]
                %2727 = vst [vmem:[%s2663 + $0xf8] sm:$0xff] %v2726
                %s2728 = sadd.s32 1, %s2661
                %p2729 = scmp.ge.s32.totalorder %s2728, %s2654
                %s2730 = scalar_select %p2729, 0, %s2728
                %s2731 = smul.u32 %s2730, 256
                %s2732 = smul.u32 %s2730, 256
                %s2733 = scalar_lea.vmem %s2634, %s2731 [#allocation2]
                %s2734 = scalar_lea.vmem %s2645, %s2732
              $region73: #{regression_nn_forward.1} parent=67 // loop_footer
                %s2658 = sadd.s32 %s2656, 1
              $region74: #{regression_nn_forward.1} parent=67 // loop_footer_branch
                %2655 = sbr.rel target = $region70
              $region75: #{regression_nn_forward.1} parent=67 // loop_exit
                _
              %s2735 = sshrl.u32 %s2641, 5
              %s2736 = sand.u32 %s2641, 31
              %s2737 = smul.u32 %s2735, 32
              %s2738 = smul.u32 8, %s2737
              %s2739 = scalar_lea.vmem %s2634, %s2738 [#allocation2]
              %s2740 = smul.u32 8, %s2737
              %s2741 = scalar_lea.vmem %s2645, %s2740
              // While loop
              $region76: #{regression_nn_forward.1} parent=67 // loop_pre_header
                _
              $region77: #{regression_nn_forward.1} parent=67 // loop_header
                %s2743 = sphi 0, %s2745
                %p2744 = scmp.ge.s32.totalorder %s2743, %s2736
                %s2748 = sphi 0, %s2755
                %s2749 = sphi %s2739, %s2758
                %s2750 = sphi %s2741, %s2759
              $region78: #{regression_nn_forward.1} parent=67 // loop_header_branch
                %2747 = sbr.rel (%p2744) target = $region82
              $region79: #{regression_nn_forward.1} parent=67 // loop_body
                %v2751 = vld [vmem:[%s2749] sm:$0xff]
                %2752 = vst [vmem:[%s2750] sm:$0xff] %v2751
                %s2753 = sadd.s32 1, %s2748
                %p2754 = scmp.ge.s32.totalorder %s2753, %s2736
                %s2755 = scalar_select %p2754, 0, %s2753
                %s2756 = smul.u32 %s2755, 8
                %s2757 = smul.u32 %s2755, 8
                %s2758 = scalar_lea.vmem %s2739, %s2756 [#allocation2]
                %s2759 = scalar_lea.vmem %s2741, %s2757
              $region80: #{regression_nn_forward.1} parent=67 // loop_footer
                %s2745 = sadd.s32 %s2743, 1
              $region81: #{regression_nn_forward.1} parent=67 // loop_footer_branch
                %2742 = sbr.rel target = $region77
              $region82: #{regression_nn_forward.1} parent=67 // loop_exit
                _
            $region68: #{regression_nn_forward.1} parent=59 // pred_fallthru
              _
          $region60: #{regression_nn_forward.1} parent=55 // pred_fallthru
            _
          %2870 = vnop
        $region56: #{regression_nn_forward.1} parent=51 // pred_fallthru
          _
      $region52: #{regression_nn_forward.1} parent=5 // pred_fallthru
        _
      %p2871 = scmp.le.s32.totalorder 2, %s14
      // Predicated region
      $region105: #{regression_nn_forward.1} parent=5 // pred_check
        %p2872 = pneg %p2871
      $region106: #{regression_nn_forward.1} parent=5 // pred_check_branch
        %2874 = sbr.rel (%p2872) target = $region108
      $region107: #{regression_nn_forward.1} parent=5 // pred_region
        %s2875 = ssub.s32 %s14, 2
        // Predicated region
        $region109: #{regression_nn_forward.1} parent=107 // pred_check
          %p2876 = pneg %p216
        $region110: #{regression_nn_forward.1} parent=107 // pred_check_branch
          %2878 = sbr.rel (%p2876) target = $region112
        $region111: #{regression_nn_forward.1} parent=107 // pred_region
          %s2879 = sand.u32 %s201, 1
          %s2880 = sand.u32 %s201, 1
          %s2881 = smul.addr %s2880, 256
          %s2882 = scalar_lea.vmem [#allocation2], %s2881
        $region112: #{regression_nn_forward.1} parent=107 // pred_fallthru
          _
      $region108: #{regression_nn_forward.1} parent=5 // pred_fallthru
        _
    $region6: #{regression_nn_forward.1} parent=1 // loop_footer
      %s18 = sadd.s32 1, %s14
    $region7: #{regression_nn_forward.1} parent=1 // loop_footer_branch
      %13 = sbr.rel target = $region3
    $region8: #{regression_nn_forward.1} parent=1 // loop_exit
      _

</llo_original>
